<compile_context>
chip_gen: v7x
topology: tpu7x:2x2x1
jax: 0.10.0
libtpu: 0.0.40
codegen_flags: <defaults>
</compile_context>

<pallas_src>
import functools
import math

import jax
import jax.numpy as jnp
from jax import lax
from jax.experimental import pallas as pl
from jax.experimental.pallas import tpu as pltpu


# ----------------------------- Pallas kernel --------------------------------
def _lstm_kernel(x_ref, in_scale_ref, in_bias_ref,
                 wih0_ref, whh0_ref, b0_ref,
                 w1f_ref, b1_ref,
                 ln_g_ref, ln_b_ref,
                 wout_ref, bout_ref,
                 out_scale_ref, out_bias_ref,
                 o_ref, *, hidden_size, seq_len):
    H = hidden_size
    Bblk, T, I = x_ref.shape
    assert T == seq_len

    whh0 = whh0_ref[...]          # (H, 4H)   gate order [i,f,o,g]
    w1f = w1f_ref[...]            # (2H, 4H)  fused [wih1_T ; whh1_T]
    b1 = b1_ref[...]              # (1, 4H)

    # ---- layer-0 input projection hoisted out of the time loop -------------
    x_all = x_ref[...].astype(jnp.float32) * in_scale_ref[...] + in_bias_ref[...]
    z0x = (jnp.dot(x_all.reshape(Bblk * T, I), wih0_ref[...],
                   preferred_element_type=jnp.float32).reshape(Bblk, T, 4 * H)
           + b0_ref[...])         # bias folded in once

    def gates(z, c):
        # Gate order [i | f | o | g]: one sigmoid pass over 3H lanes, one tanh.
        s = jax.nn.sigmoid(z[:, :3 * H])
        g = jnp.tanh(z[:, 3 * H:])
        i_g = s[:, 0 * H:1 * H]
        f_g = s[:, 1 * H:2 * H]
        o_g = s[:, 2 * H:3 * H]
        c_new = f_g * c + i_g * g
        h_new = o_g * jnp.tanh(c_new)
        return h_new, c_new

    # Zero initial hidden/cell state (as in the PyTorch forward).
    h0 = jnp.zeros((Bblk, H), jnp.float32)
    c0 = jnp.zeros((Bblk, H), jnp.float32)
    h1 = jnp.zeros((Bblk, H), jnp.float32)
    c1 = jnp.zeros((Bblk, H), jnp.float32)

    # Software wavefront over the two stacked layers: in iteration t, layer 0
    # processes step t while layer 1 processes step t-1 — the two cells are
    # data-independent, so the scheduler can overlap their MXU/EUP latency.
    # dropout=0.0 / eval mode -> no dropout between layers.
    for t in range(T + 1):
        h0_prev = h0                                   # layer-0 output at step t-1
        if t < T:
            z0 = z0x[:, t, :] + jnp.dot(h0, whh0,
                                        preferred_element_type=jnp.float32)
            h0, c0 = gates(z0, c0)
        if t > 0:
            xh = jnp.concatenate([h0_prev, h1], axis=-1)   # (Bblk, 2H)
            z1 = jnp.dot(xh, w1f, preferred_element_type=jnp.float32) + b1
            h1, c1 = gates(z1, c1)

    # rnn_output[:, -1, :] == last hidden state of the top layer.
    last = h1

    # LayerNorm over hidden dim (eps = 1e-5, PyTorch default).
    mu = jnp.mean(last, axis=-1, keepdims=True)
    var = jnp.mean((last - mu) ** 2, axis=-1, keepdims=True)
    normed = (last - mu) * lax.rsqrt(var + 1e-5)
    normed = normed * ln_g_ref[...] + ln_b_ref[...]

    # Output Linear + descale_outputs.
    y = jnp.dot(normed, wout_ref[...], preferred_element_type=jnp.float32) + bout_ref[...]
    # Note: last dim (num_outputs) is tiny -> masked store; negligible at this size.
    o_ref[...] = y * out_scale_ref[...] + out_bias_ref[...]


# ------------------------------- wrapper -------------------------------------
def rnn_forward(x, params, *, hidden_size, num_outputs, batch_block=None):
    B, T, I = x.shape
    if batch_block is None:
        batch_block = B                      # single grid step for small batches
    assert B % batch_block == 0
    grid = (B // batch_block,)

    def whole(arr):
        # Same (full) block for every grid step -> weights stay resident in VMEM.
        nd = arr.ndim
        return pl.BlockSpec(arr.shape, lambda b, _nd=nd: (0,) * _nd)

    p = params
    args = (x,
            p["in_scale"], p["in_bias"],
            p["wih0_T"], p["whh0_T"], p["b0"],
            p["w1_fused"], p["b1"],
            p["ln_g"], p["ln_b"],
            p["wout_T"], p["bout"],
            p["out_scale"], p["out_bias"])

    in_specs = [pl.BlockSpec((batch_block, T, I), lambda b: (b, 0, 0))]
    in_specs += [whole(a) for a in args[1:]]
    out_specs = pl.BlockSpec((batch_block, num_outputs), lambda b: (b, 0))

    kernel = functools.partial(_lstm_kernel, hidden_size=hidden_size, seq_len=T)
    return pl.pallas_call(
        kernel,
        grid=grid,
        in_specs=in_specs,
        out_specs=out_specs,
        out_shape=jax.ShapeDtypeStruct((B, num_outputs), jnp.float32),
        compiler_params=pltpu.CompilerParams(
            dimension_semantics=("parallel",)),   # shards batch over v7x's 2 TCs
    )(*args)


# --------------------------- pure-JAX reference -------------------------------
def rnn_reference(x, p, *, hidden_size):
    # Uses standard PyTorch gate order [i, f, g, o] and un-fused weights.
    H = hidden_size
    B, T, _ = x.shape

    def cell(x_t, h, c, wih_T, whh_T, b):
        z = x_t @ wih_T + h @ whh_T + b
        i = jax.nn.sigmoid(z[:, 0 * H:1 * H])
        f = jax.nn.sigmoid(z[:, 1 * H:2 * H])
        g = jnp.tanh(z[:, 2 * H:3 * H])
        o = jax.nn.sigmoid(z[:, 3 * H:4 * H])
        c = f * c + i * g
        return o * jnp.tanh(c), c

    h0 = c0 = h1 = c1 = jnp.zeros((B, H), jnp.float32)
    for t in range(T):
        x_t = x[:, t, :] * p["in_scale"] + p["in_bias"]
        h0, c0 = cell(x_t, h0, c0, p["wih0_T"], p["whh0_T"], p["b0"])
        h1, c1 = cell(h0, h1, c1, p["wih1_T"], p["whh1_T"], p["b1"])
    last = h1
    mu = jnp.mean(last, -1, keepdims=True)
    var = jnp.mean((last - mu) ** 2, -1, keepdims=True)
    normed = (last - mu) * lax.rsqrt(var + 1e-5) * p["ln_g"] + p["ln_b"]
    y = normed @ p["wout_T"] + p["bout"]
    return y * p["out_scale"] + p["out_bias"]


# --------------------------------- main ---------------------------------------
if __name__ == "__main__":
    # Small config consistent with RNNConfig defaults: LSTM, 2 layers, H=32.
    B, T = 2, 8          # batch, sequence_length
    I = 4                # len(config.inputs)
    O = 3                # len(config.outputs)
    H = 32               # hidden_size
    bound = 1.0 / math.sqrt(H)

    key = jax.random.PRNGKey(0)
    keys = jax.random.split(key, 12)

    def u(k, shape):
        return jax.random.uniform(k, shape, jnp.float32, -bound, bound)

    # LSTM layer 0 (input -> hidden) and layer 1 (hidden -> hidden),
    # PyTorch shapes: W_ih (4H, in), W_hh (4H, H), biases (4H,), gate order [i,f,g,o].
    wih0 = u(keys[0], (4 * H, I))
    whh0 = u(keys[1], (4 * H, H))
    bih0 = u(keys[2], (4 * H,))
    bhh0 = u(keys[3], (4 * H,))
    wih1 = u(keys[4], (4 * H, H))
    whh1 = u(keys[5], (4 * H, H))
    bih1 = u(keys[6], (4 * H,))
    bhh1 = u(keys[7], (4 * H,))

    # Output Linear(H, O).
    wout = u(keys[8], (O, H))
    bout = u(keys[9], (O,))

    # FeatureScaler (assumed affine, deterministic values).
    in_scale = jnp.linspace(0.5, 1.5, I, dtype=jnp.float32).reshape(1, I)
    in_bias = jnp.linspace(-0.2, 0.2, I, dtype=jnp.float32).reshape(1, I)
    out_scale = jnp.linspace(2.0, 3.0, O, dtype=jnp.float32).reshape(1, O)
    out_bias = jnp.linspace(-1.0, 1.0, O, dtype=jnp.float32).reshape(1, O)

    # --- kernel params: gate columns permuted to [i, f, o, g], transposed ----
    def perm_T(w):  # (4H, in) torch layout -> (in, 4H), columns in [i,f,o,g] order
        i_b, f_b, g_b, o_b = jnp.split(w, 4, axis=0)
        return jnp.concatenate([i_b, f_b, o_b, g_b], axis=0).T

    def perm_bias(b):
        i_b, f_b, g_b, o_b = jnp.split(b, 4)
        return jnp.concatenate([i_b, f_b, o_b, g_b]).reshape(1, 4 * H)

    kernel_params = {
        "in_scale": in_scale, "in_bias": in_bias,
        "out_scale": out_scale, "out_bias": out_bias,
        "wih0_T": perm_T(wih0),                 # (I, 4H)
        "whh0_T": perm_T(whh0),                 # (H, 4H)
        "b0": perm_bias(bih0 + bhh0),           # (1, 4H)
        # Layer-1 fused weights: z1 = [h0, h1] @ w1_fused + b1
        "w1_fused": jnp.concatenate([perm_T(wih1), perm_T(whh1)], axis=0),  # (2H, 4H)
        "b1": perm_bias(bih1 + bhh1),           # (1, 4H)
        "ln_g": jnp.ones((1, H), jnp.float32),
        "ln_b": jnp.zeros((1, H), jnp.float32),
        "wout_T": wout.T, "bout": bout.reshape(1, O),
    }

    # --- reference params: standard [i,f,g,o] order, un-fused -----------------
    ref_params = {
        "in_scale": in_scale, "in_bias": in_bias,
        "out_scale": out_scale, "out_bias": out_bias,
        "wih0_T": wih0.T, "whh0_T": whh0.T, "b0": (bih0 + bhh0).reshape(1, 4 * H),
        "wih1_T": wih1.T, "whh1_T": whh1.T, "b1": (bih1 + bhh1).reshape(1, 4 * H),
        "ln_g": jnp.ones((1, H), jnp.float32),
        "ln_b": jnp.zeros((1, H), jnp.float32),
        "wout_T": wout.T, "bout": bout.reshape(1, O),
    }

    x = jax.random.normal(jax.random.PRNGKey(1), (B, T, I), jnp.float32)

    out = rnn_forward(x, kernel_params, hidden_size=H, num_outputs=O)
    out = jax.block_until_ready(out)

    ref = rnn_reference(x, ref_params, hidden_size=H)
    assert out.shape == (B, O)
    assert jnp.allclose(out, ref, rtol=2e-3, atol=2e-3), (out, ref)

    print("KERNEL_OK")
</pallas_src>

<mosaic_0001>
module attributes {stable_mosaic.version = 11 : i64} {
  func.func @_lstm_kernel(%arg0: i32, %arg1: memref<2x8x4xf32, #tpu.memory_space<vmem>>, %arg2: memref<1x4xf32, #tpu.memory_space<vmem>>, %arg3: memref<1x4xf32, #tpu.memory_space<vmem>>, %arg4: memref<4x128xf32, #tpu.memory_space<vmem>>, %arg5: memref<32x128xf32, #tpu.memory_space<vmem>>, %arg6: memref<1x128xf32, #tpu.memory_space<vmem>>, %arg7: memref<64x128xf32, #tpu.memory_space<vmem>>, %arg8: memref<1x128xf32, #tpu.memory_space<vmem>>, %arg9: memref<1x32xf32, #tpu.memory_space<vmem>>, %arg10: memref<1x32xf32, #tpu.memory_space<vmem>>, %arg11: memref<32x3xf32, #tpu.memory_space<vmem>>, %arg12: memref<1x3xf32, #tpu.memory_space<vmem>>, %arg13: memref<1x3xf32, #tpu.memory_space<vmem>>, %arg14: memref<1x3xf32, #tpu.memory_space<vmem>>, %arg15: memref<2x3xf32, #tpu.memory_space<vmem>>) attributes {dimension_semantics = [#tpu.dimension_semantics<parallel>], iteration_bounds = array<i64: 1>, scalar_prefetch = 0 : i64, scratch_operands = 0 : i64, tpu.core_type = #tpu.core_type<tc>, window_params = [{transform_indices = @transform_0, window_bounds = array<i64: 2, 8, 4>}, {pipeline_mode = #tpu.pipeline_mode<synchronous>, transform_indices = @transform_1, window_bounds = array<i64: 1, 4>}, {pipeline_mode = #tpu.pipeline_mode<synchronous>, transform_indices = @transform_2, window_bounds = array<i64: 1, 4>}, {pipeline_mode = #tpu.pipeline_mode<synchronous>, transform_indices = @transform_3, window_bounds = array<i64: 4, 128>}, {pipeline_mode = #tpu.pipeline_mode<synchronous>, transform_indices = @transform_4, window_bounds = array<i64: 32, 128>}, {pipeline_mode = #tpu.pipeline_mode<synchronous>, transform_indices = @transform_5, window_bounds = array<i64: 1, 128>}, {pipeline_mode = #tpu.pipeline_mode<synchronous>, transform_indices = @transform_6, window_bounds = array<i64: 64, 128>}, {pipeline_mode = #tpu.pipeline_mode<synchronous>, transform_indices = @transform_7, window_bounds = array<i64: 1, 128>}, {pipeline_mode = #tpu.pipeline_mode<synchronous>, transform_indices = @transform_8, window_bounds = array<i64: 1, 32>}, {pipeline_mode = #tpu.pipeline_mode<synchronous>, transform_indices = @transform_9, window_bounds = array<i64: 1, 32>}, {pipeline_mode = #tpu.pipeline_mode<synchronous>, transform_indices = @transform_10, window_bounds = array<i64: 32, 3>}, {pipeline_mode = #tpu.pipeline_mode<synchronous>, transform_indices = @transform_11, window_bounds = array<i64: 1, 3>}, {pipeline_mode = #tpu.pipeline_mode<synchronous>, transform_indices = @transform_12, window_bounds = array<i64: 1, 3>}, {pipeline_mode = #tpu.pipeline_mode<synchronous>, transform_indices = @transform_13, window_bounds = array<i64: 1, 3>}, {transform_indices = @transform_14, window_bounds = array<i64: 2, 3>}]} {
    %c0 = arith.constant 0 : index
    %c0_0 = arith.constant 0 : index
    %0 = vector.load %arg5[%c0, %c0_0] : memref<32x128xf32, #tpu.memory_space<vmem>>, vector<32x128xf32>
    %c0_1 = arith.constant 0 : index
    %c0_2 = arith.constant 0 : index
    %1 = vector.load %arg7[%c0_1, %c0_2] : memref<64x128xf32, #tpu.memory_space<vmem>>, vector<64x128xf32>
    %c0_3 = arith.constant 0 : index
    %c0_4 = arith.constant 0 : index
    %2 = vector.load %arg8[%c0_3, %c0_4] : memref<1x128xf32, #tpu.memory_space<vmem>>, vector<1x128xf32>
    %c0_5 = arith.constant 0 : index
    %c0_6 = arith.constant 0 : index
    %c0_7 = arith.constant 0 : index
    %3 = vector.load %arg1[%c0_5, %c0_6, %c0_7] : memref<2x8x4xf32, #tpu.memory_space<vmem>>, vector<2x8x4xf32>
    %c0_8 = arith.constant 0 : index
    %c0_9 = arith.constant 0 : index
    %4 = vector.load %arg2[%c0_8, %c0_9] : memref<1x4xf32, #tpu.memory_space<vmem>>, vector<1x4xf32>
    %5 = vector.shape_cast %4 : vector<1x4xf32> to vector<1x1x4xf32>
    %6 = vector.broadcast %5 : vector<1x1x4xf32> to vector<2x8x4xf32>
    %7 = arith.mulf %3, %6 : vector<2x8x4xf32>
    %c0_10 = arith.constant 0 : index
    %c0_11 = arith.constant 0 : index
    %8 = vector.load %arg3[%c0_10, %c0_11] : memref<1x4xf32, #tpu.memory_space<vmem>>, vector<1x4xf32>
    %9 = vector.shape_cast %8 : vector<1x4xf32> to vector<1x1x4xf32>
    %10 = vector.broadcast %9 : vector<1x1x4xf32> to vector<2x8x4xf32>
    %11 = arith.addf %7, %10 : vector<2x8x4xf32>
    %12 = vector.shape_cast %11 : vector<2x8x4xf32> to vector<16x4xf32>
    %c0_12 = arith.constant 0 : index
    %c0_13 = arith.constant 0 : index
    %13 = vector.load %arg4[%c0_12, %c0_13] : memref<4x128xf32, #tpu.memory_space<vmem>>, vector<4x128xf32>
    %cst = arith.constant dense<0.000000e+00> : vector<16x128xf32>
    %14 = tpu.matmul %12, %13, %cst {dimension_numbers = #tpu.dot_dimension_numbers<[1], [0], [0], [1], [0, 0, 1, 1], [], []>} : vector<16x4xf32>, vector<4x128xf32>, vector<16x128xf32> -> vector<16x128xf32>
    %15 = vector.shape_cast %14 : vector<16x128xf32> to vector<2x8x128xf32>
    %c0_14 = arith.constant 0 : index
    %c0_15 = arith.constant 0 : index
    %16 = vector.load %arg6[%c0_14, %c0_15] : memref<1x128xf32, #tpu.memory_space<vmem>>, vector<1x128xf32>
    %17 = vector.shape_cast %16 : vector<1x128xf32> to vector<1x1x128xf32>
    %18 = vector.broadcast %17 : vector<1x1x128xf32> to vector<2x8x128xf32>
    %19 = arith.addf %15, %18 : vector<2x8x128xf32>
    %cst_16 = arith.constant 0.000000e+00 : f32
    %20 = vector.broadcast %cst_16 : f32 to vector<2x32xf32>
    %cst_17 = arith.constant 0.000000e+00 : f32
    %21 = vector.broadcast %cst_17 : f32 to vector<2x32xf32>
    %cst_18 = arith.constant 0.000000e+00 : f32
    %22 = vector.broadcast %cst_18 : f32 to vector<2x32xf32>
    %cst_19 = arith.constant 0.000000e+00 : f32
    %23 = vector.broadcast %cst_19 : f32 to vector<2x32xf32>
    %24 = vector.extract_strided_slice %19 {offsets = [0, 0, 0], sizes = [2, 1, 128], strides = [1, 1, 1]} : vector<2x8x128xf32> to vector<2x1x128xf32>
    %25 = vector.shape_cast %24 : vector<2x1x128xf32> to vector<2x128xf32>
    %cst_20 = arith.constant dense<0.000000e+00> : vector<2x128xf32>
    %26 = tpu.matmul %20, %0, %cst_20 {dimension_numbers = #tpu.dot_dimension_numbers<[1], [0], [0], [1], [0, 0, 1, 1], [], []>} : vector<2x32xf32>, vector<32x128xf32>, vector<2x128xf32> -> vector<2x128xf32>
    %27 = arith.addf %25, %26 : vector<2x128xf32>
    %28 = vector.extract_strided_slice %27 {offsets = [0, 0], sizes = [2, 96], strides = [1, 1]} : vector<2x128xf32> to vector<2x96xf32>
    %29 = arith.negf %28 : vector<2x96xf32>
    %30 = math.exp %29 : vector<2x96xf32>
    %cst_21 = arith.constant 1.000000e+00 : f32
    %31 = vector.broadcast %cst_21 : f32 to vector<2x96xf32>
    %32 = arith.addf %31, %30 : vector<2x96xf32>
    %33 = arith.divf %31, %32 : vector<2x96xf32>
    %34 = vector.extract_strided_slice %27 {offsets = [0, 96], sizes = [2, 32], strides = [1, 1]} : vector<2x128xf32> to vector<2x32xf32>
    %35 = math.tanh %34 : vector<2x32xf32>
    %36 = vector.extract_strided_slice %33 {offsets = [0, 0], sizes = [2, 32], strides = [1, 1]} : vector<2x96xf32> to vector<2x32xf32>
    %37 = vector.extract_strided_slice %33 {offsets = [0, 32], sizes = [2, 32], strides = [1, 1]} : vector<2x96xf32> to vector<2x32xf32>
    %38 = vector.extract_strided_slice %33 {offsets = [0, 64], sizes = [2, 32], strides = [1, 1]} : vector<2x96xf32> to vector<2x32xf32>
    %39 = arith.mulf %37, %21 : vector<2x32xf32>
    %40 = arith.mulf %36, %35 : vector<2x32xf32>
    %41 = arith.addf %39, %40 : vector<2x32xf32>
    %42 = math.tanh %41 : vector<2x32xf32>
    %43 = arith.mulf %38, %42 : vector<2x32xf32>
    %44 = vector.extract_strided_slice %19 {offsets = [0, 1, 0], sizes = [2, 1, 128], strides = [1, 1, 1]} : vector<2x8x128xf32> to vector<2x1x128xf32>
    %45 = vector.shape_cast %44 : vector<2x1x128xf32> to vector<2x128xf32>
    %cst_22 = arith.constant dense<0.000000e+00> : vector<2x128xf32>
    %46 = tpu.matmul %43, %0, %cst_22 {dimension_numbers = #tpu.dot_dimension_numbers<[1], [0], [0], [1], [0, 0, 1, 1], [], []>} : vector<2x32xf32>, vector<32x128xf32>, vector<2x128xf32> -> vector<2x128xf32>
    %47 = arith.addf %45, %46 : vector<2x128xf32>
    %48 = vector.extract_strided_slice %47 {offsets = [0, 0], sizes = [2, 96], strides = [1, 1]} : vector<2x128xf32> to vector<2x96xf32>
    %49 = arith.negf %48 : vector<2x96xf32>
    %50 = math.exp %49 : vector<2x96xf32>
    %cst_23 = arith.constant 1.000000e+00 : f32
    %51 = vector.broadcast %cst_23 : f32 to vector<2x96xf32>
    %52 = arith.addf %51, %50 : vector<2x96xf32>
    %53 = arith.divf %51, %52 : vector<2x96xf32>
    %54 = vector.extract_strided_slice %47 {offsets = [0, 96], sizes = [2, 32], strides = [1, 1]} : vector<2x128xf32> to vector<2x32xf32>
    %55 = math.tanh %54 : vector<2x32xf32>
    %56 = vector.extract_strided_slice %53 {offsets = [0, 0], sizes = [2, 32], strides = [1, 1]} : vector<2x96xf32> to vector<2x32xf32>
    %57 = vector.extract_strided_slice %53 {offsets = [0, 32], sizes = [2, 32], strides = [1, 1]} : vector<2x96xf32> to vector<2x32xf32>
    %58 = vector.extract_strided_slice %53 {offsets = [0, 64], sizes = [2, 32], strides = [1, 1]} : vector<2x96xf32> to vector<2x32xf32>
    %59 = arith.mulf %57, %41 : vector<2x32xf32>
    %60 = arith.mulf %56, %55 : vector<2x32xf32>
    %61 = arith.addf %59, %60 : vector<2x32xf32>
    %62 = math.tanh %61 : vector<2x32xf32>
    %63 = arith.mulf %58, %62 : vector<2x32xf32>
    %64 = tpu.concatenate %43, %22 in 1 : vector<2x32xf32>, vector<2x32xf32> -> vector<2x64xf32>
    %cst_24 = arith.constant dense<0.000000e+00> : vector<2x128xf32>
    %65 = tpu.matmul %64, %1, %cst_24 {dimension_numbers = #tpu.dot_dimension_numbers<[1], [0], [0], [1], [0, 0, 1, 1], [], []>} : vector<2x64xf32>, vector<64x128xf32>, vector<2x128xf32> -> vector<2x128xf32>
    %66 = vector.broadcast %2 : vector<1x128xf32> to vector<2x128xf32>
    %67 = arith.addf %65, %66 : vector<2x128xf32>
    %68 = vector.extract_strided_slice %67 {offsets = [0, 0], sizes = [2, 96], strides = [1, 1]} : vector<2x128xf32> to vector<2x96xf32>
    %69 = arith.negf %68 : vector<2x96xf32>
    %70 = math.exp %69 : vector<2x96xf32>
    %cst_25 = arith.constant 1.000000e+00 : f32
    %71 = vector.broadcast %cst_25 : f32 to vector<2x96xf32>
    %72 = arith.addf %71, %70 : vector<2x96xf32>
    %73 = arith.divf %71, %72 : vector<2x96xf32>
    %74 = vector.extract_strided_slice %67 {offsets = [0, 96], sizes = [2, 32], strides = [1, 1]} : vector<2x128xf32> to vector<2x32xf32>
    %75 = math.tanh %74 : vector<2x32xf32>
    %76 = vector.extract_strided_slice %73 {offsets = [0, 0], sizes = [2, 32], strides = [1, 1]} : vector<2x96xf32> to vector<2x32xf32>
    %77 = vector.extract_strided_slice %73 {offsets = [0, 32], sizes = [2, 32], strides = [1, 1]} : vector<2x96xf32> to vector<2x32xf32>
    %78 = vector.extract_strided_slice %73 {offsets = [0, 64], sizes = [2, 32], strides = [1, 1]} : vector<2x96xf32> to vector<2x32xf32>
    %79 = arith.mulf %77, %23 : vector<2x32xf32>
    %80 = arith.mulf %76, %75 : vector<2x32xf32>
    %81 = arith.addf %79, %80 : vector<2x32xf32>
    %82 = math.tanh %81 : vector<2x32xf32>
    %83 = arith.mulf %78, %82 : vector<2x32xf32>
    %84 = vector.extract_strided_slice %19 {offsets = [0, 2, 0], sizes = [2, 1, 128], strides = [1, 1, 1]} : vector<2x8x128xf32> to vector<2x1x128xf32>
    %85 = vector.shape_cast %84 : vector<2x1x128xf32> to vector<2x128xf32>
    %cst_26 = arith.constant dense<0.000000e+00> : vector<2x128xf32>
    %86 = tpu.matmul %63, %0, %cst_26 {dimension_numbers = #tpu.dot_dimension_numbers<[1], [0], [0], [1], [0, 0, 1, 1], [], []>} : vector<2x32xf32>, vector<32x128xf32>, vector<2x128xf32> -> vector<2x128xf32>
    %87 = arith.addf %85, %86 : vector<2x128xf32>
    %88 = vector.extract_strided_slice %87 {offsets = [0, 0], sizes = [2, 96], strides = [1, 1]} : vector<2x128xf32> to vector<2x96xf32>
    %89 = arith.negf %88 : vector<2x96xf32>
    %90 = math.exp %89 : vector<2x96xf32>
    %cst_27 = arith.constant 1.000000e+00 : f32
    %91 = vector.broadcast %cst_27 : f32 to vector<2x96xf32>
    %92 = arith.addf %91, %90 : vector<2x96xf32>
    %93 = arith.divf %91, %92 : vector<2x96xf32>
    %94 = vector.extract_strided_slice %87 {offsets = [0, 96], sizes = [2, 32], strides = [1, 1]} : vector<2x128xf32> to vector<2x32xf32>
    %95 = math.tanh %94 : vector<2x32xf32>
    %96 = vector.extract_strided_slice %93 {offsets = [0, 0], sizes = [2, 32], strides = [1, 1]} : vector<2x96xf32> to vector<2x32xf32>
    %97 = vector.extract_strided_slice %93 {offsets = [0, 32], sizes = [2, 32], strides = [1, 1]} : vector<2x96xf32> to vector<2x32xf32>
    %98 = vector.extract_strided_slice %93 {offsets = [0, 64], sizes = [2, 32], strides = [1, 1]} : vector<2x96xf32> to vector<2x32xf32>
    %99 = arith.mulf %97, %61 : vector<2x32xf32>
    %100 = arith.mulf %96, %95 : vector<2x32xf32>
    %101 = arith.addf %99, %100 : vector<2x32xf32>
    %102 = math.tanh %101 : vector<2x32xf32>
    %103 = arith.mulf %98, %102 : vector<2x32xf32>
    %104 = tpu.concatenate %63, %83 in 1 : vector<2x32xf32>, vector<2x32xf32> -> vector<2x64xf32>
    %cst_28 = arith.constant dense<0.000000e+00> : vector<2x128xf32>
    %105 = tpu.matmul %104, %1, %cst_28 {dimension_numbers = #tpu.dot_dimension_numbers<[1], [0], [0], [1], [0, 0, 1, 1], [], []>} : vector<2x64xf32>, vector<64x128xf32>, vector<2x128xf32> -> vector<2x128xf32>
    %106 = vector.broadcast %2 : vector<1x128xf32> to vector<2x128xf32>
    %107 = arith.addf %105, %106 : vector<2x128xf32>
    %108 = vector.extract_strided_slice %107 {offsets = [0, 0], sizes = [2, 96], strides = [1, 1]} : vector<2x128xf32> to vector<2x96xf32>
    %109 = arith.negf %108 : vector<2x96xf32>
    %110 = math.exp %109 : vector<2x96xf32>
    %cst_29 = arith.constant 1.000000e+00 : f32
    %111 = vector.broadcast %cst_29 : f32 to vector<2x96xf32>
    %112 = arith.addf %111, %110 : vector<2x96xf32>
    %113 = arith.divf %111, %112 : vector<2x96xf32>
    %114 = vector.extract_strided_slice %107 {offsets = [0, 96], sizes = [2, 32], strides = [1, 1]} : vector<2x128xf32> to vector<2x32xf32>
    %115 = math.tanh %114 : vector<2x32xf32>
    %116 = vector.extract_strided_slice %113 {offsets = [0, 0], sizes = [2, 32], strides = [1, 1]} : vector<2x96xf32> to vector<2x32xf32>
    %117 = vector.extract_strided_slice %113 {offsets = [0, 32], sizes = [2, 32], strides = [1, 1]} : vector<2x96xf32> to vector<2x32xf32>
    %118 = vector.extract_strided_slice %113 {offsets = [0, 64], sizes = [2, 32], strides = [1, 1]} : vector<2x96xf32> to vector<2x32xf32>
    %119 = arith.mulf %117, %81 : vector<2x32xf32>
    %120 = arith.mulf %116, %115 : vector<2x32xf32>
    %121 = arith.addf %119, %120 : vector<2x32xf32>
    %122 = math.tanh %121 : vector<2x32xf32>
    %123 = arith.mulf %118, %122 : vector<2x32xf32>
    %124 = vector.extract_strided_slice %19 {offsets = [0, 3, 0], sizes = [2, 1, 128], strides = [1, 1, 1]} : vector<2x8x128xf32> to vector<2x1x128xf32>
    %125 = vector.shape_cast %124 : vector<2x1x128xf32> to vector<2x128xf32>
    %cst_30 = arith.constant dense<0.000000e+00> : vector<2x128xf32>
    %126 = tpu.matmul %103, %0, %cst_30 {dimension_numbers = #tpu.dot_dimension_numbers<[1], [0], [0], [1], [0, 0, 1, 1], [], []>} : vector<2x32xf32>, vector<32x128xf32>, vector<2x128xf32> -> vector<2x128xf32>
    %127 = arith.addf %125, %126 : vector<2x128xf32>
    %128 = vector.extract_strided_slice %127 {offsets = [0, 0], sizes = [2, 96], strides = [1, 1]} : vector<2x128xf32> to vector<2x96xf32>
    %129 = arith.negf %128 : vector<2x96xf32>
    %130 = math.exp %129 : vector<2x96xf32>
    %cst_31 = arith.constant 1.000000e+00 : f32
    %131 = vector.broadcast %cst_31 : f32 to vector<2x96xf32>
    %132 = arith.addf %131, %130 : vector<2x96xf32>
    %133 = arith.divf %131, %132 : vector<2x96xf32>
    %134 = vector.extract_strided_slice %127 {offsets = [0, 96], sizes = [2, 32], strides = [1, 1]} : vector<2x128xf32> to vector<2x32xf32>
    %135 = math.tanh %134 : vector<2x32xf32>
    %136 = vector.extract_strided_slice %133 {offsets = [0, 0], sizes = [2, 32], strides = [1, 1]} : vector<2x96xf32> to vector<2x32xf32>
    %137 = vector.extract_strided_slice %133 {offsets = [0, 32], sizes = [2, 32], strides = [1, 1]} : vector<2x96xf32> to vector<2x32xf32>
    %138 = vector.extract_strided_slice %133 {offsets = [0, 64], sizes = [2, 32], strides = [1, 1]} : vector<2x96xf32> to vector<2x32xf32>
    %139 = arith.mulf %137, %101 : vector<2x32xf32>
    %140 = arith.mulf %136, %135 : vector<2x32xf32>
    %141 = arith.addf %139, %140 : vector<2x32xf32>
    %142 = math.tanh %141 : vector<2x32xf32>
    %143 = arith.mulf %138, %142 : vector<2x32xf32>
    %144 = tpu.concatenate %103, %123 in 1 : vector<2x32xf32>, vector<2x32xf32> -> vector<2x64xf32>
    %cst_32 = arith.constant dense<0.000000e+00> : vector<2x128xf32>
    %145 = tpu.matmul %144, %1, %cst_32 {dimension_numbers = #tpu.dot_dimension_numbers<[1], [0], [0], [1], [0, 0, 1, 1], [], []>} : vector<2x64xf32>, vector<64x128xf32>, vector<2x128xf32> -> vector<2x128xf32>
    %146 = vector.broadcast %2 : vector<1x128xf32> to vector<2x128xf32>
    %147 = arith.addf %145, %146 : vector<2x128xf32>
    %148 = vector.extract_strided_slice %147 {offsets = [0, 0], sizes = [2, 96], strides = [1, 1]} : vector<2x128xf32> to vector<2x96xf32>
    %149 = arith.negf %148 : vector<2x96xf32>
    %150 = math.exp %149 : vector<2x96xf32>
    %cst_33 = arith.constant 1.000000e+00 : f32
    %151 = vector.broadcast %cst_33 : f32 to vector<2x96xf32>
    %152 = arith.addf %151, %150 : vector<2x96xf32>
    %153 = arith.divf %151, %152 : vector<2x96xf32>
    %154 = vector.extract_strided_slice %147 {offsets = [0, 96], sizes = [2, 32], strides = [1, 1]} : vector<2x128xf32> to vector<2x32xf32>
    %155 = math.tanh %154 : vector<2x32xf32>
    %156 = vector.extract_strided_slice %153 {offsets = [0, 0], sizes = [2, 32], strides = [1, 1]} : vector<2x96xf32> to vector<2x32xf32>
    %157 = vector.extract_strided_slice %153 {offsets = [0, 32], sizes = [2, 32], strides = [1, 1]} : vector<2x96xf32> to vector<2x32xf32>
    %158 = vector.extract_strided_slice %153 {offsets = [0, 64], sizes = [2, 32], strides = [1, 1]} : vector<2x96xf32> to vector<2x32xf32>
    %159 = arith.mulf %157, %121 : vector<2x32xf32>
    %160 = arith.mulf %156, %155 : vector<2x32xf32>
    %161 = arith.addf %159, %160 : vector<2x32xf32>
    %162 = math.tanh %161 : vector<2x32xf32>
    %163 = arith.mulf %158, %162 : vector<2x32xf32>
    %164 = vector.extract_strided_slice %19 {offsets = [0, 4, 0], sizes = [2, 1, 128], strides = [1, 1, 1]} : vector<2x8x128xf32> to vector<2x1x128xf32>
    %165 = vector.shape_cast %164 : vector<2x1x128xf32> to vector<2x128xf32>
    %cst_34 = arith.constant dense<0.000000e+00> : vector<2x128xf32>
    %166 = tpu.matmul %143, %0, %cst_34 {dimension_numbers = #tpu.dot_dimension_numbers<[1], [0], [0], [1], [0, 0, 1, 1], [], []>} : vector<2x32xf32>, vector<32x128xf32>, vector<2x128xf32> -> vector<2x128xf32>
    %167 = arith.addf %165, %166 : vector<2x128xf32>
    %168 = vector.extract_strided_slice %167 {offsets = [0, 0], sizes = [2, 96], strides = [1, 1]} : vector<2x128xf32> to vector<2x96xf32>
    %169 = arith.negf %168 : vector<2x96xf32>
    %170 = math.exp %169 : vector<2x96xf32>
    %cst_35 = arith.constant 1.000000e+00 : f32
    %171 = vector.broadcast %cst_35 : f32 to vector<2x96xf32>
    %172 = arith.addf %171, %170 : vector<2x96xf32>
    %173 = arith.divf %171, %172 : vector<2x96xf32>
    %174 = vector.extract_strided_slice %167 {offsets = [0, 96], sizes = [2, 32], strides = [1, 1]} : vector<2x128xf32> to vector<2x32xf32>
    %175 = math.tanh %174 : vector<2x32xf32>
    %176 = vector.extract_strided_slice %173 {offsets = [0, 0], sizes = [2, 32], strides = [1, 1]} : vector<2x96xf32> to vector<2x32xf32>
    %177 = vector.extract_strided_slice %173 {offsets = [0, 32], sizes = [2, 32], strides = [1, 1]} : vector<2x96xf32> to vector<2x32xf32>
    %178 = vector.extract_strided_slice %173 {offsets = [0, 64], sizes = [2, 32], strides = [1, 1]} : vector<2x96xf32> to vector<2x32xf32>
    %179 = arith.mulf %177, %141 : vector<2x32xf32>
    %180 = arith.mulf %176, %175 : vector<2x32xf32>
    %181 = arith.addf %179, %180 : vector<2x32xf32>
    %182 = math.tanh %181 : vector<2x32xf32>
    %183 = arith.mulf %178, %182 : vector<2x32xf32>
    %184 = tpu.concatenate %143, %163 in 1 : vector<2x32xf32>, vector<2x32xf32> -> vector<2x64xf32>
    %cst_36 = arith.constant dense<0.000000e+00> : vector<2x128xf32>
    %185 = tpu.matmul %184, %1, %cst_36 {dimension_numbers = #tpu.dot_dimension_numbers<[1], [0], [0], [1], [0, 0, 1, 1], [], []>} : vector<2x64xf32>, vector<64x128xf32>, vector<2x128xf32> -> vector<2x128xf32>
    %186 = vector.broadcast %2 : vector<1x128xf32> to vector<2x128xf32>
    %187 = arith.addf %185, %186 : vector<2x128xf32>
    %188 = vector.extract_strided_slice %187 {offsets = [0, 0], sizes = [2, 96], strides = [1, 1]} : vector<2x128xf32> to vector<2x96xf32>
    %189 = arith.negf %188 : vector<2x96xf32>
    %190 = math.exp %189 : vector<2x96xf32>
    %cst_37 = arith.constant 1.000000e+00 : f32
    %191 = vector.broadcast %cst_37 : f32 to vector<2x96xf32>
    %192 = arith.addf %191, %190 : vector<2x96xf32>
    %193 = arith.divf %191, %192 : vector<2x96xf32>
    %194 = vector.extract_strided_slice %187 {offsets = [0, 96], sizes = [2, 32], strides = [1, 1]} : vector<2x128xf32> to vector<2x32xf32>
    %195 = math.tanh %194 : vector<2x32xf32>
    %196 = vector.extract_strided_slice %193 {offsets = [0, 0], sizes = [2, 32], strides = [1, 1]} : vector<2x96xf32> to vector<2x32xf32>
    %197 = vector.extract_strided_slice %193 {offsets = [0, 32], sizes = [2, 32], strides = [1, 1]} : vector<2x96xf32> to vector<2x32xf32>
    %198 = vector.extract_strided_slice %193 {offsets = [0, 64], sizes = [2, 32], strides = [1, 1]} : vector<2x96xf32> to vector<2x32xf32>
    %199 = arith.mulf %197, %161 : vector<2x32xf32>
    %200 = arith.mulf %196, %195 : vector<2x32xf32>
    %201 = arith.addf %199, %200 : vector<2x32xf32>
    %202 = math.tanh %201 : vector<2x32xf32>
    %203 = arith.mulf %198, %202 : vector<2x32xf32>
    %204 = vector.extract_strided_slice %19 {offsets = [0, 5, 0], sizes = [2, 1, 128], strides = [1, 1, 1]} : vector<2x8x128xf32> to vector<2x1x128xf32>
    %205 = vector.shape_cast %204 : vector<2x1x128xf32> to vector<2x128xf32>
    %cst_38 = arith.constant dense<0.000000e+00> : vector<2x128xf32>
    %206 = tpu.matmul %183, %0, %cst_38 {dimension_numbers = #tpu.dot_dimension_numbers<[1], [0], [0], [1], [0, 0, 1, 1], [], []>} : vector<2x32xf32>, vector<32x128xf32>, vector<2x128xf32> -> vector<2x128xf32>
    %207 = arith.addf %205, %206 : vector<2x128xf32>
    %208 = vector.extract_strided_slice %207 {offsets = [0, 0], sizes = [2, 96], strides = [1, 1]} : vector<2x128xf32> to vector<2x96xf32>
    %209 = arith.negf %208 : vector<2x96xf32>
    %210 = math.exp %209 : vector<2x96xf32>
    %cst_39 = arith.constant 1.000000e+00 : f32
    %211 = vector.broadcast %cst_39 : f32 to vector<2x96xf32>
    %212 = arith.addf %211, %210 : vector<2x96xf32>
    %213 = arith.divf %211, %212 : vector<2x96xf32>
    %214 = vector.extract_strided_slice %207 {offsets = [0, 96], sizes = [2, 32], strides = [1, 1]} : vector<2x128xf32> to vector<2x32xf32>
    %215 = math.tanh %214 : vector<2x32xf32>
    %216 = vector.extract_strided_slice %213 {offsets = [0, 0], sizes = [2, 32], strides = [1, 1]} : vector<2x96xf32> to vector<2x32xf32>
    %217 = vector.extract_strided_slice %213 {offsets = [0, 32], sizes = [2, 32], strides = [1, 1]} : vector<2x96xf32> to vector<2x32xf32>
    %218 = vector.extract_strided_slice %213 {offsets = [0, 64], sizes = [2, 32], strides = [1, 1]} : vector<2x96xf32> to vector<2x32xf32>
    %219 = arith.mulf %217, %181 : vector<2x32xf32>
    %220 = arith.mulf %216, %215 : vector<2x32xf32>
    %221 = arith.addf %219, %220 : vector<2x32xf32>
    %222 = math.tanh %221 : vector<2x32xf32>
    %223 = arith.mulf %218, %222 : vector<2x32xf32>
    %224 = tpu.concatenate %183, %203 in 1 : vector<2x32xf32>, vector<2x32xf32> -> vector<2x64xf32>
    %cst_40 = arith.constant dense<0.000000e+00> : vector<2x128xf32>
    %225 = tpu.matmul %224, %1, %cst_40 {dimension_numbers = #tpu.dot_dimension_numbers<[1], [0], [0], [1], [0, 0, 1, 1], [], []>} : vector<2x64xf32>, vector<64x128xf32>, vector<2x128xf32> -> vector<2x128xf32>
    %226 = vector.broadcast %2 : vector<1x128xf32> to vector<2x128xf32>
    %227 = arith.addf %225, %226 : vector<2x128xf32>
    %228 = vector.extract_strided_slice %227 {offsets = [0, 0], sizes = [2, 96], strides = [1, 1]} : vector<2x128xf32> to vector<2x96xf32>
    %229 = arith.negf %228 : vector<2x96xf32>
    %230 = math.exp %229 : vector<2x96xf32>
    %cst_41 = arith.constant 1.000000e+00 : f32
    %231 = vector.broadcast %cst_41 : f32 to vector<2x96xf32>
    %232 = arith.addf %231, %230 : vector<2x96xf32>
    %233 = arith.divf %231, %232 : vector<2x96xf32>
    %234 = vector.extract_strided_slice %227 {offsets = [0, 96], sizes = [2, 32], strides = [1, 1]} : vector<2x128xf32> to vector<2x32xf32>
    %235 = math.tanh %234 : vector<2x32xf32>
    %236 = vector.extract_strided_slice %233 {offsets = [0, 0], sizes = [2, 32], strides = [1, 1]} : vector<2x96xf32> to vector<2x32xf32>
    %237 = vector.extract_strided_slice %233 {offsets = [0, 32], sizes = [2, 32], strides = [1, 1]} : vector<2x96xf32> to vector<2x32xf32>
    %238 = vector.extract_strided_slice %233 {offsets = [0, 64], sizes = [2, 32], strides = [1, 1]} : vector<2x96xf32> to vector<2x32xf32>
    %239 = arith.mulf %237, %201 : vector<2x32xf32>
    %240 = arith.mulf %236, %235 : vector<2x32xf32>
    %241 = arith.addf %239, %240 : vector<2x32xf32>
    %242 = math.tanh %241 : vector<2x32xf32>
    %243 = arith.mulf %238, %242 : vector<2x32xf32>
    %244 = vector.extract_strided_slice %19 {offsets = [0, 6, 0], sizes = [2, 1, 128], strides = [1, 1, 1]} : vector<2x8x128xf32> to vector<2x1x128xf32>
    %245 = vector.shape_cast %244 : vector<2x1x128xf32> to vector<2x128xf32>
    %cst_42 = arith.constant dense<0.000000e+00> : vector<2x128xf32>
    %246 = tpu.matmul %223, %0, %cst_42 {dimension_numbers = #tpu.dot_dimension_numbers<[1], [0], [0], [1], [0, 0, 1, 1], [], []>} : vector<2x32xf32>, vector<32x128xf32>, vector<2x128xf32> -> vector<2x128xf32>
    %247 = arith.addf %245, %246 : vector<2x128xf32>
    %248 = vector.extract_strided_slice %247 {offsets = [0, 0], sizes = [2, 96], strides = [1, 1]} : vector<2x128xf32> to vector<2x96xf32>
    %249 = arith.negf %248 : vector<2x96xf32>
    %250 = math.exp %249 : vector<2x96xf32>
    %cst_43 = arith.constant 1.000000e+00 : f32
    %251 = vector.broadcast %cst_43 : f32 to vector<2x96xf32>
    %252 = arith.addf %251, %250 : vector<2x96xf32>
    %253 = arith.divf %251, %252 : vector<2x96xf32>
    %254 = vector.extract_strided_slice %247 {offsets = [0, 96], sizes = [2, 32], strides = [1, 1]} : vector<2x128xf32> to vector<2x32xf32>
    %255 = math.tanh %254 : vector<2x32xf32>
    %256 = vector.extract_strided_slice %253 {offsets = [0, 0], sizes = [2, 32], strides = [1, 1]} : vector<2x96xf32> to vector<2x32xf32>
    %257 = vector.extract_strided_slice %253 {offsets = [0, 32], sizes = [2, 32], strides = [1, 1]} : vector<2x96xf32> to vector<2x32xf32>
    %258 = vector.extract_strided_slice %253 {offsets = [0, 64], sizes = [2, 32], strides = [1, 1]} : vector<2x96xf32> to vector<2x32xf32>
    %259 = arith.mulf %257, %221 : vector<2x32xf32>
    %260 = arith.mulf %256, %255 : vector<2x32xf32>
    %261 = arith.addf %259, %260 : vector<2x32xf32>
    %262 = math.tanh %261 : vector<2x32xf32>
    %263 = arith.mulf %258, %262 : vector<2x32xf32>
    %264 = tpu.concatenate %223, %243 in 1 : vector<2x32xf32>, vector<2x32xf32> -> vector<2x64xf32>
    %cst_44 = arith.constant dense<0.000000e+00> : vector<2x128xf32>
    %265 = tpu.matmul %264, %1, %cst_44 {dimension_numbers = #tpu.dot_dimension_numbers<[1], [0], [0], [1], [0, 0, 1, 1], [], []>} : vector<2x64xf32>, vector<64x128xf32>, vector<2x128xf32> -> vector<2x128xf32>
    %266 = vector.broadcast %2 : vector<1x128xf32> to vector<2x128xf32>
    %267 = arith.addf %265, %266 : vector<2x128xf32>
    %268 = vector.extract_strided_slice %267 {offsets = [0, 0], sizes = [2, 96], strides = [1, 1]} : vector<2x128xf32> to vector<2x96xf32>
    %269 = arith.negf %268 : vector<2x96xf32>
    %270 = math.exp %269 : vector<2x96xf32>
    %cst_45 = arith.constant 1.000000e+00 : f32
    %271 = vector.broadcast %cst_45 : f32 to vector<2x96xf32>
    %272 = arith.addf %271, %270 : vector<2x96xf32>
    %273 = arith.divf %271, %272 : vector<2x96xf32>
    %274 = vector.extract_strided_slice %267 {offsets = [0, 96], sizes = [2, 32], strides = [1, 1]} : vector<2x128xf32> to vector<2x32xf32>
    %275 = math.tanh %274 : vector<2x32xf32>
    %276 = vector.extract_strided_slice %273 {offsets = [0, 0], sizes = [2, 32], strides = [1, 1]} : vector<2x96xf32> to vector<2x32xf32>
    %277 = vector.extract_strided_slice %273 {offsets = [0, 32], sizes = [2, 32], strides = [1, 1]} : vector<2x96xf32> to vector<2x32xf32>
    %278 = vector.extract_strided_slice %273 {offsets = [0, 64], sizes = [2, 32], strides = [1, 1]} : vector<2x96xf32> to vector<2x32xf32>
    %279 = arith.mulf %277, %241 : vector<2x32xf32>
    %280 = arith.mulf %276, %275 : vector<2x32xf32>
    %281 = arith.addf %279, %280 : vector<2x32xf32>
    %282 = math.tanh %281 : vector<2x32xf32>
    %283 = arith.mulf %278, %282 : vector<2x32xf32>
    %284 = vector.extract_strided_slice %19 {offsets = [0, 7, 0], sizes = [2, 1, 128], strides = [1, 1, 1]} : vector<2x8x128xf32> to vector<2x1x128xf32>
    %285 = vector.shape_cast %284 : vector<2x1x128xf32> to vector<2x128xf32>
    %cst_46 = arith.constant dense<0.000000e+00> : vector<2x128xf32>
    %286 = tpu.matmul %263, %0, %cst_46 {dimension_numbers = #tpu.dot_dimension_numbers<[1], [0], [0], [1], [0, 0, 1, 1], [], []>} : vector<2x32xf32>, vector<32x128xf32>, vector<2x128xf32> -> vector<2x128xf32>
    %287 = arith.addf %285, %286 : vector<2x128xf32>
    %288 = vector.extract_strided_slice %287 {offsets = [0, 0], sizes = [2, 96], strides = [1, 1]} : vector<2x128xf32> to vector<2x96xf32>
    %289 = arith.negf %288 : vector<2x96xf32>
    %290 = math.exp %289 : vector<2x96xf32>
    %cst_47 = arith.constant 1.000000e+00 : f32
    %291 = vector.broadcast %cst_47 : f32 to vector<2x96xf32>
    %292 = arith.addf %291, %290 : vector<2x96xf32>
    %293 = arith.divf %291, %292 : vector<2x96xf32>
    %294 = vector.extract_strided_slice %287 {offsets = [0, 96], sizes = [2, 32], strides = [1, 1]} : vector<2x128xf32> to vector<2x32xf32>
    %295 = math.tanh %294 : vector<2x32xf32>
    %296 = vector.extract_strided_slice %293 {offsets = [0, 0], sizes = [2, 32], strides = [1, 1]} : vector<2x96xf32> to vector<2x32xf32>
    %297 = vector.extract_strided_slice %293 {offsets = [0, 32], sizes = [2, 32], strides = [1, 1]} : vector<2x96xf32> to vector<2x32xf32>
    %298 = vector.extract_strided_slice %293 {offsets = [0, 64], sizes = [2, 32], strides = [1, 1]} : vector<2x96xf32> to vector<2x32xf32>
    %299 = arith.mulf %297, %261 : vector<2x32xf32>
    %300 = arith.mulf %296, %295 : vector<2x32xf32>
    %301 = arith.addf %299, %300 : vector<2x32xf32>
    %302 = math.tanh %301 : vector<2x32xf32>
    %303 = arith.mulf %298, %302 : vector<2x32xf32>
    %304 = tpu.concatenate %263, %283 in 1 : vector<2x32xf32>, vector<2x32xf32> -> vector<2x64xf32>
    %cst_48 = arith.constant dense<0.000000e+00> : vector<2x128xf32>
    %305 = tpu.matmul %304, %1, %cst_48 {dimension_numbers = #tpu.dot_dimension_numbers<[1], [0], [0], [1], [0, 0, 1, 1], [], []>} : vector<2x64xf32>, vector<64x128xf32>, vector<2x128xf32> -> vector<2x128xf32>
    %306 = vector.broadcast %2 : vector<1x128xf32> to vector<2x128xf32>
    %307 = arith.addf %305, %306 : vector<2x128xf32>
    %308 = vector.extract_strided_slice %307 {offsets = [0, 0], sizes = [2, 96], strides = [1, 1]} : vector<2x128xf32> to vector<2x96xf32>
    %309 = arith.negf %308 : vector<2x96xf32>
    %310 = math.exp %309 : vector<2x96xf32>
    %cst_49 = arith.constant 1.000000e+00 : f32
    %311 = vector.broadcast %cst_49 : f32 to vector<2x96xf32>
    %312 = arith.addf %311, %310 : vector<2x96xf32>
    %313 = arith.divf %311, %312 : vector<2x96xf32>
    %314 = vector.extract_strided_slice %307 {offsets = [0, 96], sizes = [2, 32], strides = [1, 1]} : vector<2x128xf32> to vector<2x32xf32>
    %315 = math.tanh %314 : vector<2x32xf32>
    %316 = vector.extract_strided_slice %313 {offsets = [0, 0], sizes = [2, 32], strides = [1, 1]} : vector<2x96xf32> to vector<2x32xf32>
    %317 = vector.extract_strided_slice %313 {offsets = [0, 32], sizes = [2, 32], strides = [1, 1]} : vector<2x96xf32> to vector<2x32xf32>
    %318 = vector.extract_strided_slice %313 {offsets = [0, 64], sizes = [2, 32], strides = [1, 1]} : vector<2x96xf32> to vector<2x32xf32>
    %319 = arith.mulf %317, %281 : vector<2x32xf32>
    %320 = arith.mulf %316, %315 : vector<2x32xf32>
    %321 = arith.addf %319, %320 : vector<2x32xf32>
    %322 = math.tanh %321 : vector<2x32xf32>
    %323 = arith.mulf %318, %322 : vector<2x32xf32>
    %324 = tpu.concatenate %303, %323 in 1 : vector<2x32xf32>, vector<2x32xf32> -> vector<2x64xf32>
    %cst_50 = arith.constant dense<0.000000e+00> : vector<2x128xf32>
    %325 = tpu.matmul %324, %1, %cst_50 {dimension_numbers = #tpu.dot_dimension_numbers<[1], [0], [0], [1], [0, 0, 1, 1], [], []>} : vector<2x64xf32>, vector<64x128xf32>, vector<2x128xf32> -> vector<2x128xf32>
    %326 = vector.broadcast %2 : vector<1x128xf32> to vector<2x128xf32>
    %327 = arith.addf %325, %326 : vector<2x128xf32>
    %328 = vector.extract_strided_slice %327 {offsets = [0, 0], sizes = [2, 96], strides = [1, 1]} : vector<2x128xf32> to vector<2x96xf32>
    %329 = arith.negf %328 : vector<2x96xf32>
    %330 = math.exp %329 : vector<2x96xf32>
    %cst_51 = arith.constant 1.000000e+00 : f32
    %331 = vector.broadcast %cst_51 : f32 to vector<2x96xf32>
    %332 = arith.addf %331, %330 : vector<2x96xf32>
    %333 = arith.divf %331, %332 : vector<2x96xf32>
    %334 = vector.extract_strided_slice %327 {offsets = [0, 96], sizes = [2, 32], strides = [1, 1]} : vector<2x128xf32> to vector<2x32xf32>
    %335 = math.tanh %334 : vector<2x32xf32>
    %336 = vector.extract_strided_slice %333 {offsets = [0, 0], sizes = [2, 32], strides = [1, 1]} : vector<2x96xf32> to vector<2x32xf32>
    %337 = vector.extract_strided_slice %333 {offsets = [0, 32], sizes = [2, 32], strides = [1, 1]} : vector<2x96xf32> to vector<2x32xf32>
    %338 = vector.extract_strided_slice %333 {offsets = [0, 64], sizes = [2, 32], strides = [1, 1]} : vector<2x96xf32> to vector<2x32xf32>
    %339 = arith.mulf %337, %321 : vector<2x32xf32>
    %340 = arith.mulf %336, %335 : vector<2x32xf32>
    %341 = arith.addf %339, %340 : vector<2x32xf32>
    %342 = math.tanh %341 : vector<2x32xf32>
    %343 = arith.mulf %338, %342 : vector<2x32xf32>
    %cst_52 = arith.constant dense<0.000000e+00> : vector<2xf32>
    %344 = vector.multi_reduction <add>, %343, %cst_52 [1] : vector<2x32xf32> to vector<2xf32>
    %345 = vector.shape_cast %344 : vector<2xf32> to vector<2x1xf32>
    %cst_53 = arith.constant 3.200000e+01 : f32
    %346 = vector.broadcast %cst_53 : f32 to vector<2x1xf32>
    %347 = arith.divf %345, %346 : vector<2x1xf32>
    %348 = vector.broadcast %347 : vector<2x1xf32> to vector<2x32xf32>
    %349 = arith.subf %343, %348 : vector<2x32xf32>
    %350 = arith.mulf %349, %349 : vector<2x32xf32>
    %cst_54 = arith.constant dense<0.000000e+00> : vector<2xf32>
    %351 = vector.multi_reduction <add>, %350, %cst_54 [1] : vector<2x32xf32> to vector<2xf32>
    %352 = vector.shape_cast %351 : vector<2xf32> to vector<2x1xf32>
    %cst_55 = arith.constant 3.200000e+01 : f32
    %353 = vector.broadcast %cst_55 : f32 to vector<2x1xf32>
    %354 = arith.divf %352, %353 : vector<2x1xf32>
    %355 = vector.broadcast %347 : vector<2x1xf32> to vector<2x32xf32>
    %356 = arith.subf %343, %355 : vector<2x32xf32>
    %cst_56 = arith.constant 9.99999974E-6 : f32
    %357 = vector.broadcast %cst_56 : f32 to vector<2x1xf32>
    %358 = arith.addf %354, %357 : vector<2x1xf32>
    %359 = math.rsqrt %358 : vector<2x1xf32>
    %360 = vector.broadcast %359 : vector<2x1xf32> to vector<2x32xf32>
    %361 = arith.mulf %356, %360 : vector<2x32xf32>
    %c0_57 = arith.constant 0 : index
    %c0_58 = arith.constant 0 : index
    %362 = vector.load %arg9[%c0_57, %c0_58] : memref<1x32xf32, #tpu.memory_space<vmem>>, vector<1x32xf32>
    %363 = vector.broadcast %362 : vector<1x32xf32> to vector<2x32xf32>
    %364 = arith.mulf %361, %363 : vector<2x32xf32>
    %c0_59 = arith.constant 0 : index
    %c0_60 = arith.constant 0 : index
    %365 = vector.load %arg10[%c0_59, %c0_60] : memref<1x32xf32, #tpu.memory_space<vmem>>, vector<1x32xf32>
    %366 = vector.broadcast %365 : vector<1x32xf32> to vector<2x32xf32>
    %367 = arith.addf %364, %366 : vector<2x32xf32>
    %c0_61 = arith.constant 0 : index
    %c0_62 = arith.constant 0 : index
    %368 = vector.load %arg11[%c0_61, %c0_62] : memref<32x3xf32, #tpu.memory_space<vmem>>, vector<32x3xf32>
    %cst_63 = arith.constant dense<0.000000e+00> : vector<2x3xf32>
    %369 = tpu.matmul %367, %368, %cst_63 {dimension_numbers = #tpu.dot_dimension_numbers<[1], [0], [0], [1], [0, 0, 1, 1], [], []>} : vector<2x32xf32>, vector<32x3xf32>, vector<2x3xf32> -> vector<2x3xf32>
    %c0_64 = arith.constant 0 : index
    %c0_65 = arith.constant 0 : index
    %370 = vector.load %arg12[%c0_64, %c0_65] : memref<1x3xf32, #tpu.memory_space<vmem>>, vector<1x3xf32>
    %371 = vector.broadcast %370 : vector<1x3xf32> to vector<2x3xf32>
    %372 = arith.addf %369, %371 : vector<2x3xf32>
    %c0_66 = arith.constant 0 : index
    %c0_67 = arith.constant 0 : index
    %373 = vector.load %arg13[%c0_66, %c0_67] : memref<1x3xf32, #tpu.memory_space<vmem>>, vector<1x3xf32>
    %374 = vector.broadcast %373 : vector<1x3xf32> to vector<2x3xf32>
    %375 = arith.mulf %372, %374 : vector<2x3xf32>
    %c0_68 = arith.constant 0 : index
    %c0_69 = arith.constant 0 : index
    %376 = vector.load %arg14[%c0_68, %c0_69] : memref<1x3xf32, #tpu.memory_space<vmem>>, vector<1x3xf32>
    %377 = vector.broadcast %376 : vector<1x3xf32> to vector<2x3xf32>
    %378 = arith.addf %375, %377 : vector<2x3xf32>
    %c0_70 = arith.constant 0 : index
    %c0_71 = arith.constant 0 : index
    %379 = vector.load %arg15[%c0_70, %c0_71] : memref<2x3xf32, #tpu.memory_space<vmem>>, vector<2x3xf32>
    tpu.vector_store %arg15[%c0_70, %c0_71], %378 {strides = array<i32>} : memref<2x3xf32, #tpu.memory_space<vmem>>, vector<2x3xf32>,
    return
  }
  func.func @transform_0(%arg0: i32) -> (i32, i32, i32) {
    %c0_i32 = arith.constant 0 : i32
    %c0_i32_0 = arith.constant 0 : i32
    %c0_i32_1 = arith.constant 0 : i32
    return %arg0, %c0_i32, %c0_i32_0 : i32, i32, i32
  }
  func.func @transform_1(%arg0: i32) -> (i32, i32) {
    %c0_i32 = arith.constant 0 : i32
    %c0_i32_0 = arith.constant 0 : i32
    %c0_i32_1 = arith.constant 0 : i32
    return %c0_i32, %c0_i32_0 : i32, i32
  }
  func.func @transform_2(%arg0: i32) -> (i32, i32) {
    %c0_i32 = arith.constant 0 : i32
    %c0_i32_0 = arith.constant 0 : i32
    %c0_i32_1 = arith.constant 0 : i32
    return %c0_i32, %c0_i32_0 : i32, i32
  }
  func.func @transform_3(%arg0: i32) -> (i32, i32) {
    %c0_i32 = arith.constant 0 : i32
    %c0_i32_0 = arith.constant 0 : i32
    %c0_i32_1 = arith.constant 0 : i32
    return %c0_i32, %c0_i32_0 : i32, i32
  }
  func.func @transform_4(%arg0: i32) -> (i32, i32) {
    %c0_i32 = arith.constant 0 : i32
    %c0_i32_0 = arith.constant 0 : i32
    %c0_i32_1 = arith.constant 0 : i32
    return %c0_i32, %c0_i32_0 : i32, i32
  }
  func.func @transform_5(%arg0: i32) -> (i32, i32) {
    %c0_i32 = arith.constant 0 : i32
    %c0_i32_0 = arith.constant 0 : i32
    %c0_i32_1 = arith.constant 0 : i32
    return %c0_i32, %c0_i32_0 : i32, i32
  }
  func.func @transform_6(%arg0: i32) -> (i32, i32) {
    %c0_i32 = arith.constant 0 : i32
    %c0_i32_0 = arith.constant 0 : i32
    %c0_i32_1 = arith.constant 0 : i32
    return %c0_i32, %c0_i32_0 : i32, i32
  }
  func.func @transform_7(%arg0: i32) -> (i32, i32) {
    %c0_i32 = arith.constant 0 : i32
    %c0_i32_0 = arith.constant 0 : i32
    %c0_i32_1 = arith.constant 0 : i32
    return %c0_i32, %c0_i32_0 : i32, i32
  }
  func.func @transform_8(%arg0: i32) -> (i32, i32) {
    %c0_i32 = arith.constant 0 : i32
    %c0_i32_0 = arith.constant 0 : i32
    %c0_i32_1 = arith.constant 0 : i32
    return %c0_i32, %c0_i32_0 : i32, i32
  }
  func.func @transform_9(%arg0: i32) -> (i32, i32) {
    %c0_i32 = arith.constant 0 : i32
    %c0_i32_0 = arith.constant 0 : i32
    %c0_i32_1 = arith.constant 0 : i32
    return %c0_i32, %c0_i32_0 : i32, i32
  }
  func.func @transform_10(%arg0: i32) -> (i32, i32) {
    %c0_i32 = arith.constant 0 : i32
    %c0_i32_0 = arith.constant 0 : i32
    %c0_i32_1 = arith.constant 0 : i32
    return %c0_i32, %c0_i32_0 : i32, i32
  }
  func.func @transform_11(%arg0: i32) -> (i32, i32) {
    %c0_i32 = arith.constant 0 : i32
    %c0_i32_0 = arith.constant 0 : i32
    %c0_i32_1 = arith.constant 0 : i32
    return %c0_i32, %c0_i32_0 : i32, i32
  }
  func.func @transform_12(%arg0: i32) -> (i32, i32) {
    %c0_i32 = arith.constant 0 : i32
    %c0_i32_0 = arith.constant 0 : i32
    %c0_i32_1 = arith.constant 0 : i32
    return %c0_i32, %c0_i32_0 : i32, i32
  }
  func.func @transform_13(%arg0: i32) -> (i32, i32) {
    %c0_i32 = arith.constant 0 : i32
    %c0_i32_0 = arith.constant 0 : i32
    %c0_i32_1 = arith.constant 0 : i32
    return %c0_i32, %c0_i32_0 : i32, i32
  }
  func.func @transform_14(%arg0: i32) -> (i32, i32) {
    %c0_i32 = arith.constant 0 : i32
    %c0_i32_0 = arith.constant 0 : i32
    return %arg0, %c0_i32 : i32, i32
  }
}

</mosaic_0001>

<llo_original>
// kernel: tpu_custom_call.1
$region0: #{tpu_custom_call.1}
  #allocation0 [shape = 'u32[]', space=smem, size = 0x4, offset = 0x4, fixed_abs, tag = 'smem constant byte address 0x4 - core index']
  #allocation1 [shape = 'u32[144,128]{1,0:T(1,128)}', space=vmem, size = 0x12000, scoped, tag = 'internal scratch']
  %s0 = inlined_call_operand.vmem [shape: f32[2,8,4], index: 0, kind: input, shape index: {}]
  %s1 = inlined_call_operand.vmem [shape: f32[1,4], index: 1, kind: input, shape index: {}]
  %s2 = inlined_call_operand.vmem [shape: f32[1,4], index: 2, kind: input, shape index: {}]
  %s3 = inlined_call_operand.vmem [shape: f32[4,128], index: 3, kind: input, shape index: {}]
  %s4 = inlined_call_operand.hbm [shape: f32[32,128], index: 4, kind: input, shape index: {}]
  %s5 = inlined_call_operand.vmem [shape: f32[1,128], index: 5, kind: input, shape index: {}]
  %s6 = inlined_call_operand.vmem [shape: f32[64,128], index: 6, kind: input, shape index: {}]
  %s7 = inlined_call_operand.vmem [shape: f32[1,128], index: 7, kind: input, shape index: {}]
  %s8 = inlined_call_operand.vmem [shape: f32[1,32], index: 8, kind: input, shape index: {}]
  %s9 = inlined_call_operand.vmem [shape: f32[1,32], index: 9, kind: input, shape index: {}]
  %s10 = inlined_call_operand.vmem [shape: f32[32,3], index: 10, kind: input, shape index: {}]
  %s11 = inlined_call_operand.vmem [shape: f32[1,3], index: 11, kind: input, shape index: {}]
  %s12 = inlined_call_operand.vmem [shape: f32[1,3], index: 12, kind: input, shape index: {}]
  %s13 = inlined_call_operand.vmem [shape: f32[1,3], index: 13, kind: input, shape index: {}]
  %s14 = inlined_call_operand.hbm [shape: f32[2,3], index: 14, kind: output, shape index: {}]
  %s15 = sld [smem:[#allocation0]]
  $region70: #{tpu_custom_call.1} parent=0
    _
  %s17 = ssub.s32 1, %s15
  %s18 = scalar_select 0, %s17, %s15
  $region1: #{tpu_custom_call.1} parent=0
    #allocation2 [shape = 'u8[16384]{0}', space=vmem, size = 0x4000, scoped, tag = 'input window, operand 4, single buffered']
    #allocation3 [shape = 's32[1]{0}', space=sflag, size = 0x4, scoped, tag = 'scoped memory for tpu_custom_call.1']
    #allocation4 [shape = 's32[1]{0}', space=sflag, size = 0x4, scoped, tag = 'scoped memory for tpu_custom_call.1']
    #allocation5 [shape = 'u8[1024]{0}', space=vmem, size = 0x400, scoped, tag = 'output window, operand 0, single buffered']
    %19 = vsyncpa [#allocation3], 0
    %20 = vsyncpa [#allocation4], 0
    // Predicated region
    $region2: #{tpu_custom_call.1} parent=1 // pred_check
      _
    $region3: #{tpu_custom_call.1} parent=1 // pred_check_branch
      %22 = sbr.rel (0) target = $region5
    $region4: #{tpu_custom_call.1} parent=1 // pred_region
      _
    $region5: #{tpu_custom_call.1} parent=1 // pred_fallthru
      _
    // Predicated region
    $region6: #{tpu_custom_call.1} parent=1 // pred_check
      _
    $region7: #{tpu_custom_call.1} parent=1 // pred_check_branch
      %24 = sbr.rel (0) target = $region9
    $region8: #{tpu_custom_call.1} parent=1 // pred_region
      _
    $region9: #{tpu_custom_call.1} parent=1 // pred_fallthru
      _
    // Predicated region
    $region10: #{tpu_custom_call.1} parent=1 // pred_check
      _
    $region11: #{tpu_custom_call.1} parent=1 // pred_check_branch
      %26 = sbr.rel (0) target = $region13
    $region12: #{tpu_custom_call.1} parent=1 // pred_region
      _
    $region13: #{tpu_custom_call.1} parent=1 // pred_fallthru
      _
    // Predicated region
    $region14: #{tpu_custom_call.1} parent=1 // pred_check
      _
    $region15: #{tpu_custom_call.1} parent=1 // pred_check_branch
      %28 = sbr.rel (0) target = $region17
    $region16: #{tpu_custom_call.1} parent=1 // pred_region
      _
    $region17: #{tpu_custom_call.1} parent=1 // pred_fallthru
      _
    // Predicated region
    $region18: #{tpu_custom_call.1} parent=1 // pred_check
      _
    $region19: #{tpu_custom_call.1} parent=1 // pred_check_branch
      %30 = sbr.rel (0) target = $region21
    $region20: #{tpu_custom_call.1} parent=1 // pred_region
      %s32 = ssub.s32 512, 512
      %33 = vsyncadd [#allocation3], %s32
      %s34 = sshll.u32 [#allocation2], 4
      %s35 = int_to_ptr.vmem [resolvable:$true] %s34
      %40 = dma.hbm_to_vmem [thread:$0]  %s4, 512, %s35, [#allocation3], 128, 128, 8
    $region21: #{tpu_custom_call.1} parent=1 // pred_fallthru
      _
    // Predicated region
    $region22: #{tpu_custom_call.1} parent=1 // pred_check
      _
    $region23: #{tpu_custom_call.1} parent=1 // pred_check_branch
      %42 = sbr.rel (0) target = $region25
    $region24: #{tpu_custom_call.1} parent=1 // pred_region
      _
    $region25: #{tpu_custom_call.1} parent=1 // pred_fallthru
      _
    // Predicated region
    $region26: #{tpu_custom_call.1} parent=1 // pred_check
      _
    $region27: #{tpu_custom_call.1} parent=1 // pred_check_branch
      %44 = sbr.rel (0) target = $region29
    $region28: #{tpu_custom_call.1} parent=1 // pred_region
      _
    $region29: #{tpu_custom_call.1} parent=1 // pred_fallthru
      _
    // Predicated region
    $region30: #{tpu_custom_call.1} parent=1 // pred_check
      _
    $region31: #{tpu_custom_call.1} parent=1 // pred_check_branch
      %46 = sbr.rel (0) target = $region33
    $region32: #{tpu_custom_call.1} parent=1 // pred_region
      _
    $region33: #{tpu_custom_call.1} parent=1 // pred_fallthru
      _
    // Predicated region
    $region34: #{tpu_custom_call.1} parent=1 // pred_check
      _
    $region35: #{tpu_custom_call.1} parent=1 // pred_check_branch
      %48 = sbr.rel (0) target = $region37
    $region36: #{tpu_custom_call.1} parent=1 // pred_region
      _
    $region37: #{tpu_custom_call.1} parent=1 // pred_fallthru
      _
    // Predicated region
    $region38: #{tpu_custom_call.1} parent=1 // pred_check
      _
    $region39: #{tpu_custom_call.1} parent=1 // pred_check_branch
      %50 = sbr.rel (0) target = $region41
    $region40: #{tpu_custom_call.1} parent=1 // pred_region
      _
    $region41: #{tpu_custom_call.1} parent=1 // pred_fallthru
      _
    // Predicated region
    $region42: #{tpu_custom_call.1} parent=1 // pred_check
      _
    $region43: #{tpu_custom_call.1} parent=1 // pred_check_branch
      %52 = sbr.rel (0) target = $region45
    $region44: #{tpu_custom_call.1} parent=1 // pred_region
      _
    $region45: #{tpu_custom_call.1} parent=1 // pred_fallthru
      _
    // Predicated region
    $region46: #{tpu_custom_call.1} parent=1 // pred_check
      _
    $region47: #{tpu_custom_call.1} parent=1 // pred_check_branch
      %54 = sbr.rel (0) target = $region49
    $region48: #{tpu_custom_call.1} parent=1 // pred_region
      _
    $region49: #{tpu_custom_call.1} parent=1 // pred_fallthru
      _
    // Predicated region
    $region50: #{tpu_custom_call.1} parent=1 // pred_check
      _
    $region51: #{tpu_custom_call.1} parent=1 // pred_check_branch
      %56 = sbr.rel (0) target = $region53
    $region52: #{tpu_custom_call.1} parent=1 // pred_region
      _
    $region53: #{tpu_custom_call.1} parent=1 // pred_fallthru
      _
    // Predicated region
    $region54: #{tpu_custom_call.1} parent=1 // pred_check
      _
    $region55: #{tpu_custom_call.1} parent=1 // pred_check_branch
      %58 = sbr.rel (0) target = $region57
    $region56: #{tpu_custom_call.1} parent=1 // pred_region
      _
    $region57: #{tpu_custom_call.1} parent=1 // pred_fallthru
      _
    // Predicated region
    $region58: #{tpu_custom_call.1} parent=1 // pred_check
      _
    $region59: #{tpu_custom_call.1} parent=1 // pred_check_branch
      %60 = sbr.rel (0) target = $region61
    $region60: #{tpu_custom_call.1} parent=1 // pred_region
      %61 = dma.done [#allocation3], 512
    $region61: #{tpu_custom_call.1} parent=1 // pred_fallthru
      _
    %v62 = vld [vmem:[#allocation2] sm:$0xff]
    %v63 = vld [vmem:[#allocation2 + $0x8] sm:$0xff]
    %v64 = vld [vmem:[#allocation2 + $0x10] sm:$0xff]
    %v65 = vld [vmem:[#allocation2 + $0x18] sm:$0xff]
    %v66 = vld [vmem:[%s6] sm:$0xff]
    %v67 = vld [vmem:[%s6 + $0x8] sm:$0xff]
    %v68 = vld [vmem:[%s6 + $0x10] sm:$0xff]
    %v69 = vld [vmem:[%s6 + $0x18] sm:$0xff]
    %v70 = vld [vmem:[%s6 + $0x20] sm:$0xff]
    %v71 = vld [vmem:[%s6 + $0x28] sm:$0xff]
    %v72 = vld [vmem:[%s6 + $0x30] sm:$0xff]
    %v73 = vld [vmem:[%s6 + $0x38] sm:$0xff]
    %v74 = vld [vmem:[%s7] sm:$0x1]
    %v75 = vld [vmem:[%s0] sm:$0xff]
    %v76 = vld [vmem:[%s0 + $0x8] sm:$0xff]
    %v77 = vld [vmem:[%s1] sm:$0x1]
    %v79 = vlaneseq
    %v80 = vshrl.u32 %v79, 7
    %v81 = vsub.s32 0, %v80
    %v82 = vrot.slane %v77, %v81
    %v84 = vmul.f32 %v75, %v82
    %v85 = vmul.f32 %v76, %v82
    %v86 = vld [vmem:[%s2] sm:$0x1]
    %v88 = vlaneseq
    %v89 = vshrl.u32 %v88, 7
    %v90 = vsub.s32 0, %v89
    %v91 = vrot.slane %v86, %v90
    %v93 = vadd.f32 %v84, %v91
    %v94 = vadd.f32 %v85, %v91
    %v95 = vld [vmem:[%s3] sm:$0xf]
    %vm96 = vcmask 31744
    %v98 = vsel %vm96, %v93, 0
    %v101 = vsel %vm96, %v94, 0
    %vm103 = vcmask 1043456
    %v105 = vsel %vm103, %v95, 0
    %107 = vmatprep.subr.mxu0 0.0
    %108 = vmatpush1.msra.mxu0 %v105
    %109 = vmatprep.subr.mxu0 0.0
    %110 = vmatpush1.msra.mxu0 0.0
    %111 = vmatprep.subr.mxu0 0.0
    %112 = vmatpush1.msra.mxu0 0.0
    %113 = vmatprep.subr.mxu0 0.0
    %114 = vmatpush1.msra.mxu0 0.0
    %115 = vmatprep.subr.mxu0 0.0
    %116 = vmatpush1.msra.mxu0 0.0
    %117 = vmatprep.subr.mxu0 0.0
    %118 = vmatpush1.msra.mxu0 0.0
    %119 = vmatprep.subr.mxu0 0.0
    %120 = vmatpush1.msra.mxu0 0.0
    %121 = vmatprep.subr.mxu0 0.0
    %122 = vmatpush1.msra.mxu0 0.0
    %123 = vmatprep.subr.mxu0 0.0
    %124 = vmatpush1.msra.mxu0 0.0
    %125 = vmatprep.subr.mxu0 0.0
    %126 = vmatpush1.msra.mxu0 0.0
    %127 = vmatprep.subr.mxu0 0.0
    %128 = vmatpush1.msra.mxu0 0.0
    %129 = vmatprep.subr.mxu0 0.0
    %130 = vmatpush1.msra.mxu0 0.0
    %131 = vmatprep.subr.mxu0 0.0
    %132 = vmatpush1.msra.mxu0 0.0
    %133 = vmatprep.subr.mxu0 0.0
    %134 = vmatpush1.msra.mxu0 0.0
    %135 = vmatprep.subr.mxu0 0.0
    %136 = vmatpush1.msra.mxu0 0.0
    %137 = vmatprep.subr.mxu0 0.0
    %138 = vmatpush1.msra.mxu0 0.0
    %139 = vmatprep.subr.mxu0 0.0
    %140 = vmatpush1.msra.mxu0 0.0
    %141 = vmatprep.subr.mxu0 0.0
    %142 = vmatpush1.msra.mxu0 0.0
    %143 = vmatprep.subr.mxu0 0.0
    %144 = vmatpush1.msra.mxu0 0.0
    %145 = vmatprep.subr.mxu0 0.0
    %146 = vmatpush1.msra.mxu0 0.0
    %147 = vmatprep.subr.mxu0 0.0
    %148 = vmatpush1.msra.mxu0 0.0
    %149 = vmatprep.subr.mxu0 0.0
    %150 = vmatpush1.msra.mxu0 0.0
    %151 = vmatprep.subr.mxu0 0.0
    %152 = vmatpush1.msra.mxu0 0.0
    %153 = vmatprep.subr.mxu0 0.0
    %154 = vmatpush1.msra.mxu0 0.0
    %155 = vmatprep.subr.mxu0 0.0
    %156 = vmatpush1.msra.mxu0 0.0
    %157 = vmatprep.subr.mxu0 0.0
    %158 = vmatpush1.msra.mxu0 0.0
    %159 = vmatprep.subr.mxu0 0.0
    %160 = vmatpush1.msra.mxu0 0.0
    %161 = vmatprep.subr.mxu0 0.0
    %162 = vmatpush1.msra.mxu0 0.0
    %163 = vmatprep.subr.mxu0 0.0
    %164 = vmatpush1.msra.mxu0 0.0
    %165 = vmatprep.subr.mxu0 0.0
    %166 = vmatpush1.msra.mxu0 0.0
    %167 = vmatprep.subr.mxu0 0.0
    %168 = vmatpush1.msra.mxu0 0.0
    %169 = vmatprep.subr.mxu0 0.0
    %170 = vmatpush1.msra.mxu0 0.0
    %171 = vmatprep.mubr.f32.mxu0 0.0
    %172 = vmatmul.mubr.f32.gmra.mrb[0].mxu0 %v98
    %v173 = vpop.f32.mrb[0].mxu0
    %v174 = vadd.f32 0.0, %v173
    %v175 = vpop.f32.mrb[0].mxu0
    %176 = vmatprep.mubr.f32.mxu0 0.0
    %177 = vmatmul.mubr.f32.gmra.mrb[0].mxu0 %v101
    %v178 = vpop.f32.mrb[0].mxu0
    %v179 = vadd.f32 0.0, %v178
    %v180 = vpop.f32.mrb[0].mxu0
    %181 = vdwg.mxu0
    %v182 = vld [vmem:[%s5] sm:$0x1]
    %v184 = vlaneseq
    %v185 = vshrl.u32 %v184, 7
    %v186 = vsub.s32 0, %v185
    %v187 = vrot.slane %v182, %v186
    %v189 = vadd.f32 %v174, %v187
    %v190 = vadd.f32 %v179, %v187
    %vm191 = vcmask 261120
    %v193 = vsel %vm191, 0.0, 0
    %195 = vmatprep.subr.mxu0 0.0
    %196 = vmatpush1.msra.mxu0 %v62
    %197 = vmatprep.subr.mxu0 0.0
    %198 = vmatpush1.msra.mxu0 %v63
    %199 = vmatprep.subr.mxu0 0.0
    %200 = vmatpush1.msra.mxu0 %v64
    %201 = vmatprep.subr.mxu0 0.0
    %202 = vmatpush1.msra.mxu0 %v65
    %203 = vmatprep.subr.mxu0 0.0
    %204 = vmatpush1.msra.mxu0 0.0
    %205 = vmatprep.subr.mxu0 0.0
    %206 = vmatpush1.msra.mxu0 0.0
    %207 = vmatprep.subr.mxu0 0.0
    %208 = vmatpush1.msra.mxu0 0.0
    %209 = vmatprep.subr.mxu0 0.0
    %210 = vmatpush1.msra.mxu0 0.0
    %211 = vmatprep.subr.mxu0 0.0
    %212 = vmatpush1.msra.mxu0 0.0
    %213 = vmatprep.subr.mxu0 0.0
    %214 = vmatpush1.msra.mxu0 0.0
    %215 = vmatprep.subr.mxu0 0.0
    %216 = vmatpush1.msra.mxu0 0.0
    %217 = vmatprep.subr.mxu0 0.0
    %218 = vmatpush1.msra.mxu0 0.0
    %219 = vmatprep.subr.mxu0 0.0
    %220 = vmatpush1.msra.mxu0 0.0
    %221 = vmatprep.subr.mxu0 0.0
    %222 = vmatpush1.msra.mxu0 0.0
    %223 = vmatprep.subr.mxu0 0.0
    %224 = vmatpush1.msra.mxu0 0.0
    %225 = vmatprep.subr.mxu0 0.0
    %226 = vmatpush1.msra.mxu0 0.0
    %227 = vmatprep.subr.mxu0 0.0
    %228 = vmatpush1.msra.mxu0 0.0
    %229 = vmatprep.subr.mxu0 0.0
    %230 = vmatpush1.msra.mxu0 0.0
    %231 = vmatprep.subr.mxu0 0.0
    %232 = vmatpush1.msra.mxu0 0.0
    %233 = vmatprep.subr.mxu0 0.0
    %234 = vmatpush1.msra.mxu0 0.0
    %235 = vmatprep.subr.mxu0 0.0
    %236 = vmatpush1.msra.mxu0 0.0
    %237 = vmatprep.subr.mxu0 0.0
    %238 = vmatpush1.msra.mxu0 0.0
    %239 = vmatprep.subr.mxu0 0.0
    %240 = vmatpush1.msra.mxu0 0.0
    %241 = vmatprep.subr.mxu0 0.0
    %242 = vmatpush1.msra.mxu0 0.0
    %243 = vmatprep.subr.mxu0 0.0
    %244 = vmatpush1.msra.mxu0 0.0
    %245 = vmatprep.subr.mxu0 0.0
    %246 = vmatpush1.msra.mxu0 0.0
    %247 = vmatprep.subr.mxu0 0.0
    %248 = vmatpush1.msra.mxu0 0.0
    %249 = vmatprep.subr.mxu0 0.0
    %250 = vmatpush1.msra.mxu0 0.0
    %251 = vmatprep.subr.mxu0 0.0
    %252 = vmatpush1.msra.mxu0 0.0
    %253 = vmatprep.subr.mxu0 0.0
    %254 = vmatpush1.msra.mxu0 0.0
    %255 = vmatprep.subr.mxu0 0.0
    %256 = vmatpush1.msra.mxu0 0.0
    %257 = vmatprep.subr.mxu0 0.0
    %258 = vmatpush1.msra.mxu0 0.0
    %259 = vmatprep.mubr.f32.mxu0 0.0
    %260 = vmatmul.mubr.f32.gmra.mrb[0].mxu0 %v193
    %v261 = vpop.f32.mrb[0].mxu0
    %v262 = vadd.f32 0.0, %v261
    %v263 = vpop.f32.mrb[0].mxu0
    %264 = vdwg.mxu0
    %v266 = vrot.slane %v262, 1
    %v269 = vadd.f32 %v189, %v262
    %v270 = vadd.f32 %v190, %v266
    %v271 = vxor.u32 %v269, 2147483648
    %v272 = vxor.u32 %v270, 2147483648
    %v273 = vmul.f32 %v271, 1.442695
    %v274 = vpow.pop %v273
    %v275 = vmul.f32 %v272, 1.442695
    %v276 = vpow.pop %v275
    %v277 = vadd.f32 %v274, 1.0
    %v278 = vadd.f32 %v276, 1.0
    %v279 = vrcp.pop %v277
    %v280 = vmul.f32 1.0, %v279
    %v281 = vrcp.pop %v278
    %v282 = vmul.f32 1.0, %v281
    %v283 = vtanh.pop %v269
    %v284 = vtanh.pop %v270
    %v285 = vmul.f32 %v280, 0.0
    %v286 = vmul.f32 %v282, 0.0
    %289 = vrot.lane.b32.xlu0 %v283, 32
    %v290 = vpop.permute.xlu0 %289
    %291 = vrot.lane.b32.xlu0 %v284, 32
    %v292 = vpop.permute.xlu0 %291
    %v295 = vmul.f32 %v280, %v290
    %v296 = vmul.f32 %v282, %v292
    %299 = vrot.lane.b32.xlu0 %v295, 32
    %v300 = vpop.permute.xlu0 %299
    %301 = vrot.lane.b32.xlu0 %v296, 32
    %v302 = vpop.permute.xlu0 %301
    %v305 = vadd.f32 %v285, %v300
    %v306 = vadd.f32 %v286, %v302
    %v307 = vtanh.pop %v305
    %v308 = vtanh.pop %v306
    %311 = vrot.lane.b32.xlu0 %v307, 32
    %v312 = vpop.permute.xlu0 %311
    %313 = vrot.lane.b32.xlu0 %v308, 32
    %v314 = vpop.permute.xlu0 %313
    %v317 = vmul.f32 %v280, %v312
    %v318 = vmul.f32 %v282, %v314
    %v321 = vrot.slane %v318, 7
    %vm322 = vcmask 1041409
    %v323 = vsel %vm322, %v321, %v317
    %324 = vrot.lane.b32.xlu0 %v323, 64
    %v325 = vpop.permute.xlu0 %324
    %v326 = vsel %vm191, %v325, 0
    %328 = vmatprep.subr.mxu0 0.0
    %329 = vmatpush1.msra.mxu0 %v62
    %330 = vmatprep.subr.mxu0 0.0
    %331 = vmatpush1.msra.mxu0 %v63
    %332 = vmatprep.subr.mxu0 0.0
    %333 = vmatpush1.msra.mxu0 %v64
    %334 = vmatprep.subr.mxu0 0.0
    %335 = vmatpush1.msra.mxu0 %v65
    %336 = vmatprep.subr.mxu0 0.0
    %337 = vmatpush1.msra.mxu0 0.0
    %338 = vmatprep.subr.mxu0 0.0
    %339 = vmatpush1.msra.mxu0 0.0
    %340 = vmatprep.subr.mxu0 0.0
    %341 = vmatpush1.msra.mxu0 0.0
    %342 = vmatprep.subr.mxu0 0.0
    %343 = vmatpush1.msra.mxu0 0.0
    %344 = vmatprep.subr.mxu0 0.0
    %345 = vmatpush1.msra.mxu0 0.0
    %346 = vmatprep.subr.mxu0 0.0
    %347 = vmatpush1.msra.mxu0 0.0
    %348 = vmatprep.subr.mxu0 0.0
    %349 = vmatpush1.msra.mxu0 0.0
    %350 = vmatprep.subr.mxu0 0.0
    %351 = vmatpush1.msra.mxu0 0.0
    %352 = vmatprep.subr.mxu0 0.0
    %353 = vmatpush1.msra.mxu0 0.0
    %354 = vmatprep.subr.mxu0 0.0
    %355 = vmatpush1.msra.mxu0 0.0
    %356 = vmatprep.subr.mxu0 0.0
    %357 = vmatpush1.msra.mxu0 0.0
    %358 = vmatprep.subr.mxu0 0.0
    %359 = vmatpush1.msra.mxu0 0.0
    %360 = vmatprep.subr.mxu0 0.0
    %361 = vmatpush1.msra.mxu0 0.0
    %362 = vmatprep.subr.mxu0 0.0
    %363 = vmatpush1.msra.mxu0 0.0
    %364 = vmatprep.subr.mxu0 0.0
    %365 = vmatpush1.msra.mxu0 0.0
    %366 = vmatprep.subr.mxu0 0.0
    %367 = vmatpush1.msra.mxu0 0.0
    %368 = vmatprep.subr.mxu0 0.0
    %369 = vmatpush1.msra.mxu0 0.0
    %370 = vmatprep.subr.mxu0 0.0
    %371 = vmatpush1.msra.mxu0 0.0
    %372 = vmatprep.subr.mxu0 0.0
    %373 = vmatpush1.msra.mxu0 0.0
    %374 = vmatprep.subr.mxu0 0.0
    %375 = vmatpush1.msra.mxu0 0.0
    %376 = vmatprep.subr.mxu0 0.0
    %377 = vmatpush1.msra.mxu0 0.0
    %378 = vmatprep.subr.mxu0 0.0
    %379 = vmatpush1.msra.mxu0 0.0
    %380 = vmatprep.subr.mxu0 0.0
    %381 = vmatpush1.msra.mxu0 0.0
    %382 = vmatprep.subr.mxu0 0.0
    %383 = vmatpush1.msra.mxu0 0.0
    %384 = vmatprep.subr.mxu0 0.0
    %385 = vmatpush1.msra.mxu0 0.0
    %386 = vmatprep.subr.mxu0 0.0
    %387 = vmatpush1.msra.mxu0 0.0
    %388 = vmatprep.subr.mxu0 0.0
    %389 = vmatpush1.msra.mxu0 0.0
    %390 = vmatprep.subr.mxu0 0.0
    %391 = vmatpush1.msra.mxu0 0.0
    %392 = vmatprep.mubr.f32.mxu0 0.0
    %393 = vmatmul.mubr.f32.gmra.mrb[0].mxu0 %v326
    %v394 = vpop.f32.mrb[0].mxu0
    %v395 = vadd.f32 0.0, %v394
    %v396 = vpop.f32.mrb[0].mxu0
    %397 = vdwg.mxu0
    %v399 = vrot.slane %v395, 7
    %v402 = vadd.f32 %v189, %v399
    %v403 = vadd.f32 %v190, %v395
    %v404 = vxor.u32 %v402, 2147483648
    %v405 = vxor.u32 %v403, 2147483648
    %v406 = vmul.f32 %v404, 1.442695
    %v407 = vpow.pop %v406
    %v408 = vmul.f32 %v405, 1.442695
    %v409 = vpow.pop %v408
    %v410 = vadd.f32 %v407, 1.0
    %v411 = vadd.f32 %v409, 1.0
    %v412 = vrcp.pop %v410
    %v413 = vmul.f32 1.0, %v412
    %v414 = vrcp.pop %v411
    %v415 = vmul.f32 1.0, %v414
    %v416 = vtanh.pop %v402
    %v417 = vtanh.pop %v403
    %v420 = vrot.slane %v305, 7
    %v421 = vrot.slane %v306, 7
    %v424 = vmul.f32 %v413, %v420
    %v425 = vmul.f32 %v415, %v421
    %428 = vrot.lane.b32.xlu0 %v416, 32
    %v429 = vpop.permute.xlu0 %428
    %430 = vrot.lane.b32.xlu0 %v417, 32
    %v431 = vpop.permute.xlu0 %430
    %v434 = vmul.f32 %v413, %v429
    %v435 = vmul.f32 %v415, %v431
    %438 = vrot.lane.b32.xlu0 %v434, 32
    %v439 = vpop.permute.xlu0 %438
    %440 = vrot.lane.b32.xlu0 %v435, 32
    %v441 = vpop.permute.xlu0 %440
    %v444 = vadd.f32 %v424, %v439
    %v445 = vadd.f32 %v425, %v441
    %v446 = vtanh.pop %v444
    %v447 = vtanh.pop %v445
    %450 = vrot.lane.b32.xlu0 %v446, 32
    %v451 = vpop.permute.xlu0 %450
    %452 = vrot.lane.b32.xlu0 %v447, 32
    %v453 = vpop.permute.xlu0 %452
    %v456 = vmul.f32 %v413, %v451
    %v457 = vmul.f32 %v415, %v453
    %v459 = vsel %vm191, %v325, 0.0
    %v461 = vlaneseq
    %v462 = vshrl.u32 %v461, 7
    %v463 = vsub.s32 0, %v462
    %v464 = vrot.slane %v74, %v463
    %vm466 = vcmask 523264
    %v468 = vsel %vm466, %v459, 0
    %470 = vmatprep.subr.mxu0 0.0
    %471 = vmatpush1.msra.mxu0 %v66
    %472 = vmatprep.subr.mxu0 0.0
    %473 = vmatpush1.msra.mxu0 %v67
    %474 = vmatprep.subr.mxu0 0.0
    %475 = vmatpush1.msra.mxu0 %v68
    %476 = vmatprep.subr.mxu0 0.0
    %477 = vmatpush1.msra.mxu0 %v69
    %478 = vmatprep.subr.mxu0 0.0
    %479 = vmatpush1.msra.mxu0 %v70
    %480 = vmatprep.subr.mxu0 0.0
    %481 = vmatpush1.msra.mxu0 %v71
    %482 = vmatprep.subr.mxu0 0.0
    %483 = vmatpush1.msra.mxu0 %v72
    %484 = vmatprep.subr.mxu0 0.0
    %485 = vmatpush1.msra.mxu0 %v73
    %486 = vmatprep.subr.mxu0 0.0
    %487 = vmatpush1.msra.mxu0 0.0
    %488 = vmatprep.subr.mxu0 0.0
    %489 = vmatpush1.msra.mxu0 0.0
    %490 = vmatprep.subr.mxu0 0.0
    %491 = vmatpush1.msra.mxu0 0.0
    %492 = vmatprep.subr.mxu0 0.0
    %493 = vmatpush1.msra.mxu0 0.0
    %494 = vmatprep.subr.mxu0 0.0
    %495 = vmatpush1.msra.mxu0 0.0
    %496 = vmatprep.subr.mxu0 0.0
    %497 = vmatpush1.msra.mxu0 0.0
    %498 = vmatprep.subr.mxu0 0.0
    %499 = vmatpush1.msra.mxu0 0.0
    %500 = vmatprep.subr.mxu0 0.0
    %501 = vmatpush1.msra.mxu0 0.0
    %502 = vmatprep.subr.mxu0 0.0
    %503 = vmatpush1.msra.mxu0 0.0
    %504 = vmatprep.subr.mxu0 0.0
    %505 = vmatpush1.msra.mxu0 0.0
    %506 = vmatprep.subr.mxu0 0.0
    %507 = vmatpush1.msra.mxu0 0.0
    %508 = vmatprep.subr.mxu0 0.0
    %509 = vmatpush1.msra.mxu0 0.0
    %510 = vmatprep.subr.mxu0 0.0
    %511 = vmatpush1.msra.mxu0 0.0
    %512 = vmatprep.subr.mxu0 0.0
    %513 = vmatpush1.msra.mxu0 0.0
    %514 = vmatprep.subr.mxu0 0.0
    %515 = vmatpush1.msra.mxu0 0.0
    %516 = vmatprep.subr.mxu0 0.0
    %517 = vmatpush1.msra.mxu0 0.0
    %518 = vmatprep.subr.mxu0 0.0
    %519 = vmatpush1.msra.mxu0 0.0
    %520 = vmatprep.subr.mxu0 0.0
    %521 = vmatpush1.msra.mxu0 0.0
    %522 = vmatprep.subr.mxu0 0.0
    %523 = vmatpush1.msra.mxu0 0.0
    %524 = vmatprep.subr.mxu0 0.0
    %525 = vmatpush1.msra.mxu0 0.0
    %526 = vmatprep.subr.mxu0 0.0
    %527 = vmatpush1.msra.mxu0 0.0
    %528 = vmatprep.subr.mxu0 0.0
    %529 = vmatpush1.msra.mxu0 0.0
    %530 = vmatprep.subr.mxu0 0.0
    %531 = vmatpush1.msra.mxu0 0.0
    %532 = vmatprep.subr.mxu0 0.0
    %533 = vmatpush1.msra.mxu0 0.0
    %534 = vmatprep.mubr.f32.mxu0 0.0
    %535 = vmatmul.mubr.f32.gmra.mrb[0].mxu0 %v468
    %v536 = vpop.f32.mrb[0].mxu0
    %v537 = vadd.f32 %v464, %v536
    %v538 = vpop.f32.mrb[0].mxu0
    %539 = vdwg.mxu0
    %v540 = vxor.u32 %v537, 2147483648
    %v541 = vmul.f32 %v540, 1.442695
    %v542 = vpow.pop %v541
    %v543 = vadd.f32 %v542, 1.0
    %v544 = vrcp.pop %v543
    %v545 = vmul.f32 1.0, %v544
    %v546 = vtanh.pop %v537
    %v547 = vmul.f32 %v545, 0.0
    %549 = vrot.lane.b32.xlu0 %v546, 32
    %v550 = vpop.permute.xlu0 %549
    %v552 = vmul.f32 %v545, %v550
    %554 = vrot.lane.b32.xlu0 %v552, 32
    %v555 = vpop.permute.xlu0 %554
    %v557 = vadd.f32 %v547, %v555
    %v558 = vtanh.pop %v557
    %560 = vrot.lane.b32.xlu0 %v558, 32
    %v561 = vpop.permute.xlu0 %560
    %v563 = vmul.f32 %v545, %v561
    %v566 = vrot.slane %v456, 1
    %v567 = vsel %vm322, %v457, %v566
    %568 = vrot.lane.b32.xlu0 %v567, 64
    %v569 = vpop.permute.xlu0 %568
    %v570 = vsel %vm191, %v569, 0
    %572 = vmatprep.subr.mxu0 0.0
    %573 = vmatpush1.msra.mxu0 %v62
    %574 = vmatprep.subr.mxu0 0.0
    %575 = vmatpush1.msra.mxu0 %v63
    %576 = vmatprep.subr.mxu0 0.0
    %577 = vmatpush1.msra.mxu0 %v64
    %578 = vmatprep.subr.mxu0 0.0
    %579 = vmatpush1.msra.mxu0 %v65
    %580 = vmatprep.subr.mxu0 0.0
    %581 = vmatpush1.msra.mxu0 0.0
    %582 = vmatprep.subr.mxu0 0.0
    %583 = vmatpush1.msra.mxu0 0.0
    %584 = vmatprep.subr.mxu0 0.0
    %585 = vmatpush1.msra.mxu0 0.0
    %586 = vmatprep.subr.mxu0 0.0
    %587 = vmatpush1.msra.mxu0 0.0
    %588 = vmatprep.subr.mxu0 0.0
    %589 = vmatpush1.msra.mxu0 0.0
    %590 = vmatprep.subr.mxu0 0.0
    %591 = vmatpush1.msra.mxu0 0.0
    %592 = vmatprep.subr.mxu0 0.0
    %593 = vmatpush1.msra.mxu0 0.0
    %594 = vmatprep.subr.mxu0 0.0
    %595 = vmatpush1.msra.mxu0 0.0
    %596 = vmatprep.subr.mxu0 0.0
    %597 = vmatpush1.msra.mxu0 0.0
    %598 = vmatprep.subr.mxu0 0.0
    %599 = vmatpush1.msra.mxu0 0.0
    %600 = vmatprep.subr.mxu0 0.0
    %601 = vmatpush1.msra.mxu0 0.0
    %602 = vmatprep.subr.mxu0 0.0
    %603 = vmatpush1.msra.mxu0 0.0
    %604 = vmatprep.subr.mxu0 0.0
    %605 = vmatpush1.msra.mxu0 0.0
    %606 = vmatprep.subr.mxu0 0.0
    %607 = vmatpush1.msra.mxu0 0.0
    %608 = vmatprep.subr.mxu0 0.0
    %609 = vmatpush1.msra.mxu0 0.0
    %610 = vmatprep.subr.mxu0 0.0
    %611 = vmatpush1.msra.mxu0 0.0
    %612 = vmatprep.subr.mxu0 0.0
    %613 = vmatpush1.msra.mxu0 0.0
    %614 = vmatprep.subr.mxu0 0.0
    %615 = vmatpush1.msra.mxu0 0.0
    %616 = vmatprep.subr.mxu0 0.0
    %617 = vmatpush1.msra.mxu0 0.0
    %618 = vmatprep.subr.mxu0 0.0
    %619 = vmatpush1.msra.mxu0 0.0
    %620 = vmatprep.subr.mxu0 0.0
    %621 = vmatpush1.msra.mxu0 0.0
    %622 = vmatprep.subr.mxu0 0.0
    %623 = vmatpush1.msra.mxu0 0.0
    %624 = vmatprep.subr.mxu0 0.0
    %625 = vmatpush1.msra.mxu0 0.0
    %626 = vmatprep.subr.mxu0 0.0
    %627 = vmatpush1.msra.mxu0 0.0
    %628 = vmatprep.subr.mxu0 0.0
    %629 = vmatpush1.msra.mxu0 0.0
    %630 = vmatprep.subr.mxu0 0.0
    %631 = vmatpush1.msra.mxu0 0.0
    %632 = vmatprep.subr.mxu0 0.0
    %633 = vmatpush1.msra.mxu0 0.0
    %634 = vmatprep.subr.mxu0 0.0
    %635 = vmatpush1.msra.mxu0 0.0
    %636 = vmatprep.mubr.f32.mxu0 0.0
    %637 = vmatmul.mubr.f32.gmra.mrb[0].mxu0 %v570
    %v638 = vpop.f32.mrb[0].mxu0
    %v639 = vadd.f32 0.0, %v638
    %v640 = vpop.f32.mrb[0].mxu0
    %641 = vdwg.mxu0
    %v643 = vrot.slane %v639, 6
    %v644 = vrot.slane %v639, 7
    %v647 = vadd.f32 %v189, %v643
    %v648 = vadd.f32 %v190, %v644
    %v649 = vxor.u32 %v647, 2147483648
    %v650 = vxor.u32 %v648, 2147483648
    %v651 = vmul.f32 %v649, 1.442695
    %v652 = vpow.pop %v651
    %v653 = vmul.f32 %v650, 1.442695
    %v654 = vpow.pop %v653
    %v655 = vadd.f32 %v652, 1.0
    %v656 = vadd.f32 %v654, 1.0
    %v657 = vrcp.pop %v655
    %v658 = vmul.f32 1.0, %v657
    %v659 = vrcp.pop %v656
    %v660 = vmul.f32 1.0, %v659
    %v661 = vtanh.pop %v647
    %v662 = vtanh.pop %v648
    %v665 = vrot.slane %v444, 7
    %v666 = vrot.slane %v445, 7
    %v669 = vmul.f32 %v658, %v665
    %v670 = vmul.f32 %v660, %v666
    %673 = vrot.lane.b32.xlu0 %v661, 32
    %v674 = vpop.permute.xlu0 %673
    %675 = vrot.lane.b32.xlu0 %v662, 32
    %v676 = vpop.permute.xlu0 %675
    %v679 = vmul.f32 %v658, %v674
    %v680 = vmul.f32 %v660, %v676
    %683 = vrot.lane.b32.xlu0 %v679, 32
    %v684 = vpop.permute.xlu0 %683
    %685 = vrot.lane.b32.xlu0 %v680, 32
    %v686 = vpop.permute.xlu0 %685
    %v689 = vadd.f32 %v669, %v684
    %v690 = vadd.f32 %v670, %v686
    %v691 = vtanh.pop %v689
    %v692 = vtanh.pop %v690
    %695 = vrot.lane.b32.xlu0 %v691, 32
    %v696 = vpop.permute.xlu0 %695
    %697 = vrot.lane.b32.xlu0 %v692, 32
    %v698 = vpop.permute.xlu0 %697
    %v701 = vmul.f32 %v658, %v696
    %v702 = vmul.f32 %v660, %v698
    %v703 = vrot.slane %v457, 7
    %vm704 = vcmask 1042434
    %v705 = vsel %vm704, %v703, %v456
    %706 = vrot.lane.b32.xlu0 %v705, 64
    %v707 = vpop.permute.xlu0 %706
    %v710 = vrot.slane %v563, 7
    %711 = vrot.lane.b32.xlu0 %v710, 96
    %v712 = vpop.permute.xlu0 %711
    %v714 = vsel %vm191, %v707, %v712
    %v716 = vrot.slane %v714, 1
    %v717 = vsel %vm466, %v716, 0
    %719 = vmatprep.subr.mxu0 0.0
    %720 = vmatpush1.msra.mxu0 %v66
    %721 = vmatprep.subr.mxu0 0.0
    %722 = vmatpush1.msra.mxu0 %v67
    %723 = vmatprep.subr.mxu0 0.0
    %724 = vmatpush1.msra.mxu0 %v68
    %725 = vmatprep.subr.mxu0 0.0
    %726 = vmatpush1.msra.mxu0 %v69
    %727 = vmatprep.subr.mxu0 0.0
    %728 = vmatpush1.msra.mxu0 %v70
    %729 = vmatprep.subr.mxu0 0.0
    %730 = vmatpush1.msra.mxu0 %v71
    %731 = vmatprep.subr.mxu0 0.0
    %732 = vmatpush1.msra.mxu0 %v72
    %733 = vmatprep.subr.mxu0 0.0
    %734 = vmatpush1.msra.mxu0 %v73
    %735 = vmatprep.subr.mxu0 0.0
    %736 = vmatpush1.msra.mxu0 0.0
    %737 = vmatprep.subr.mxu0 0.0
    %738 = vmatpush1.msra.mxu0 0.0
    %739 = vmatprep.subr.mxu0 0.0
    %740 = vmatpush1.msra.mxu0 0.0
    %741 = vmatprep.subr.mxu0 0.0
    %742 = vmatpush1.msra.mxu0 0.0
    %743 = vmatprep.subr.mxu0 0.0
    %744 = vmatpush1.msra.mxu0 0.0
    %745 = vmatprep.subr.mxu0 0.0
    %746 = vmatpush1.msra.mxu0 0.0
    %747 = vmatprep.subr.mxu0 0.0
    %748 = vmatpush1.msra.mxu0 0.0
    %749 = vmatprep.subr.mxu0 0.0
    %750 = vmatpush1.msra.mxu0 0.0
    %751 = vmatprep.subr.mxu0 0.0
    %752 = vmatpush1.msra.mxu0 0.0
    %753 = vmatprep.subr.mxu0 0.0
    %754 = vmatpush1.msra.mxu0 0.0
    %755 = vmatprep.subr.mxu0 0.0
    %756 = vmatpush1.msra.mxu0 0.0
    %757 = vmatprep.subr.mxu0 0.0
    %758 = vmatpush1.msra.mxu0 0.0
    %759 = vmatprep.subr.mxu0 0.0
    %760 = vmatpush1.msra.mxu0 0.0
    %761 = vmatprep.subr.mxu0 0.0
    %762 = vmatpush1.msra.mxu0 0.0
    %763 = vmatprep.subr.mxu0 0.0
    %764 = vmatpush1.msra.mxu0 0.0
    %765 = vmatprep.subr.mxu0 0.0
    %766 = vmatpush1.msra.mxu0 0.0
    %767 = vmatprep.subr.mxu0 0.0
    %768 = vmatpush1.msra.mxu0 0.0
    %769 = vmatprep.subr.mxu0 0.0
    %770 = vmatpush1.msra.mxu0 0.0
    %771 = vmatprep.subr.mxu0 0.0
    %772 = vmatpush1.msra.mxu0 0.0
    %773 = vmatprep.subr.mxu0 0.0
    %774 = vmatpush1.msra.mxu0 0.0
    %775 = vmatprep.subr.mxu0 0.0
    %776 = vmatpush1.msra.mxu0 0.0
    %777 = vmatprep.subr.mxu0 0.0
    %778 = vmatpush1.msra.mxu0 0.0
    %779 = vmatprep.subr.mxu0 0.0
    %780 = vmatpush1.msra.mxu0 0.0
    %781 = vmatprep.subr.mxu0 0.0
    %782 = vmatpush1.msra.mxu0 0.0
    %783 = vmatprep.mubr.f32.mxu0 0.0
    %784 = vmatmul.mubr.f32.gmra.mrb[0].mxu0 %v717
    %v785 = vpop.f32.mrb[0].mxu0
    %v786 = vadd.f32 %v464, %v785
    %v787 = vpop.f32.mrb[0].mxu0
    %788 = vdwg.mxu0
    %v789 = vxor.u32 %v786, 2147483648
    %v790 = vmul.f32 %v789, 1.442695
    %v791 = vpow.pop %v790
    %v792 = vadd.f32 %v791, 1.0
    %v793 = vrcp.pop %v792
    %v794 = vmul.f32 1.0, %v793
    %v795 = vtanh.pop %v786
    %v796 = vmul.f32 %v794, %v557
    %798 = vrot.lane.b32.xlu0 %v795, 32
    %v799 = vpop.permute.xlu0 %798
    %v801 = vmul.f32 %v794, %v799
    %803 = vrot.lane.b32.xlu0 %v801, 32
    %v804 = vpop.permute.xlu0 %803
    %v806 = vadd.f32 %v796, %v804
    %v807 = vtanh.pop %v806
    %809 = vrot.lane.b32.xlu0 %v807, 32
    %v810 = vpop.permute.xlu0 %809
    %v812 = vmul.f32 %v794, %v810
    %v815 = vrot.slane %v701, 2
    %v816 = vrot.slane %v702, 1
    %v817 = vsel %vm322, %v816, %v815
    %818 = vrot.lane.b32.xlu0 %v817, 64
    %v819 = vpop.permute.xlu0 %818
    %v820 = vsel %vm191, %v819, 0
    %822 = vmatprep.subr.mxu0 0.0
    %823 = vmatpush1.msra.mxu0 %v62
    %824 = vmatprep.subr.mxu0 0.0
    %825 = vmatpush1.msra.mxu0 %v63
    %826 = vmatprep.subr.mxu0 0.0
    %827 = vmatpush1.msra.mxu0 %v64
    %828 = vmatprep.subr.mxu0 0.0
    %829 = vmatpush1.msra.mxu0 %v65
    %830 = vmatprep.subr.mxu0 0.0
    %831 = vmatpush1.msra.mxu0 0.0
    %832 = vmatprep.subr.mxu0 0.0
    %833 = vmatpush1.msra.mxu0 0.0
    %834 = vmatprep.subr.mxu0 0.0
    %835 = vmatpush1.msra.mxu0 0.0
    %836 = vmatprep.subr.mxu0 0.0
    %837 = vmatpush1.msra.mxu0 0.0
    %838 = vmatprep.subr.mxu0 0.0
    %839 = vmatpush1.msra.mxu0 0.0
    %840 = vmatprep.subr.mxu0 0.0
    %841 = vmatpush1.msra.mxu0 0.0
    %842 = vmatprep.subr.mxu0 0.0
    %843 = vmatpush1.msra.mxu0 0.0
    %844 = vmatprep.subr.mxu0 0.0
    %845 = vmatpush1.msra.mxu0 0.0
    %846 = vmatprep.subr.mxu0 0.0
    %847 = vmatpush1.msra.mxu0 0.0
    %848 = vmatprep.subr.mxu0 0.0
    %849 = vmatpush1.msra.mxu0 0.0
    %850 = vmatprep.subr.mxu0 0.0
    %851 = vmatpush1.msra.mxu0 0.0
    %852 = vmatprep.subr.mxu0 0.0
    %853 = vmatpush1.msra.mxu0 0.0
    %854 = vmatprep.subr.mxu0 0.0
    %855 = vmatpush1.msra.mxu0 0.0
    %856 = vmatprep.subr.mxu0 0.0
    %857 = vmatpush1.msra.mxu0 0.0
    %858 = vmatprep.subr.mxu0 0.0
    %859 = vmatpush1.msra.mxu0 0.0
    %860 = vmatprep.subr.mxu0 0.0
    %861 = vmatpush1.msra.mxu0 0.0
    %862 = vmatprep.subr.mxu0 0.0
    %863 = vmatpush1.msra.mxu0 0.0
    %864 = vmatprep.subr.mxu0 0.0
    %865 = vmatpush1.msra.mxu0 0.0
    %866 = vmatprep.subr.mxu0 0.0
    %867 = vmatpush1.msra.mxu0 0.0
    %868 = vmatprep.subr.mxu0 0.0
    %869 = vmatpush1.msra.mxu0 0.0
    %870 = vmatprep.subr.mxu0 0.0
    %871 = vmatpush1.msra.mxu0 0.0
    %872 = vmatprep.subr.mxu0 0.0
    %873 = vmatpush1.msra.mxu0 0.0
    %874 = vmatprep.subr.mxu0 0.0
    %875 = vmatpush1.msra.mxu0 0.0
    %876 = vmatprep.subr.mxu0 0.0
    %877 = vmatpush1.msra.mxu0 0.0
    %878 = vmatprep.subr.mxu0 0.0
    %879 = vmatpush1.msra.mxu0 0.0
    %880 = vmatprep.subr.mxu0 0.0
    %881 = vmatpush1.msra.mxu0 0.0
    %882 = vmatprep.subr.mxu0 0.0
    %883 = vmatpush1.msra.mxu0 0.0
    %884 = vmatprep.subr.mxu0 0.0
    %885 = vmatpush1.msra.mxu0 0.0
    %886 = vmatprep.mubr.f32.mxu0 0.0
    %887 = vmatmul.mubr.f32.gmra.mrb[0].mxu0 %v820
    %v888 = vpop.f32.mrb[0].mxu0
    %v889 = vadd.f32 0.0, %v888
    %v890 = vpop.f32.mrb[0].mxu0
    %891 = vdwg.mxu0
    %v893 = vrot.slane %v889, 5
    %v894 = vrot.slane %v889, 6
    %v897 = vadd.f32 %v189, %v893
    %v898 = vadd.f32 %v190, %v894
    %v899 = vxor.u32 %v897, 2147483648
    %v900 = vxor.u32 %v898, 2147483648
    %v901 = vmul.f32 %v899, 1.442695
    %v902 = vpow.pop %v901
    %v903 = vmul.f32 %v900, 1.442695
    %v904 = vpow.pop %v903
    %v905 = vadd.f32 %v902, 1.0
    %v906 = vadd.f32 %v904, 1.0
    %v907 = vrcp.pop %v905
    %v908 = vmul.f32 1.0, %v907
    %v909 = vrcp.pop %v906
    %v910 = vmul.f32 1.0, %v909
    %v911 = vtanh.pop %v897
    %v912 = vtanh.pop %v898
    %v915 = vrot.slane %v689, 7
    %v916 = vrot.slane %v690, 7
    %v919 = vmul.f32 %v908, %v915
    %v920 = vmul.f32 %v910, %v916
    %923 = vrot.lane.b32.xlu0 %v911, 32
    %v924 = vpop.permute.xlu0 %923
    %925 = vrot.lane.b32.xlu0 %v912, 32
    %v926 = vpop.permute.xlu0 %925
    %v929 = vmul.f32 %v908, %v924
    %v930 = vmul.f32 %v910, %v926
    %933 = vrot.lane.b32.xlu0 %v929, 32
    %v934 = vpop.permute.xlu0 %933
    %935 = vrot.lane.b32.xlu0 %v930, 32
    %v936 = vpop.permute.xlu0 %935
    %v939 = vadd.f32 %v919, %v934
    %v940 = vadd.f32 %v920, %v936
    %v941 = vtanh.pop %v939
    %v942 = vtanh.pop %v940
    %945 = vrot.lane.b32.xlu0 %v941, 32
    %v946 = vpop.permute.xlu0 %945
    %947 = vrot.lane.b32.xlu0 %v942, 32
    %v948 = vpop.permute.xlu0 %947
    %v951 = vmul.f32 %v908, %v946
    %v952 = vmul.f32 %v910, %v948
    %v953 = vrot.slane %v702, 7
    %vm954 = vcmask 1043459
    %v955 = vsel %vm954, %v953, %v701
    %956 = vrot.lane.b32.xlu0 %v955, 64
    %v957 = vpop.permute.xlu0 %956
    %v960 = vrot.slane %v812, 6
    %961 = vrot.lane.b32.xlu0 %v960, 96
    %v962 = vpop.permute.xlu0 %961
    %v964 = vsel %vm191, %v957, %v962
    %v966 = vrot.slane %v964, 2
    %v967 = vsel %vm466, %v966, 0
    %969 = vmatprep.subr.mxu0 0.0
    %970 = vmatpush1.msra.mxu0 %v66
    %971 = vmatprep.subr.mxu0 0.0
    %972 = vmatpush1.msra.mxu0 %v67
    %973 = vmatprep.subr.mxu0 0.0
    %974 = vmatpush1.msra.mxu0 %v68
    %975 = vmatprep.subr.mxu0 0.0
    %976 = vmatpush1.msra.mxu0 %v69
    %977 = vmatprep.subr.mxu0 0.0
    %978 = vmatpush1.msra.mxu0 %v70
    %979 = vmatprep.subr.mxu0 0.0
    %980 = vmatpush1.msra.mxu0 %v71
    %981 = vmatprep.subr.mxu0 0.0
    %982 = vmatpush1.msra.mxu0 %v72
    %983 = vmatprep.subr.mxu0 0.0
    %984 = vmatpush1.msra.mxu0 %v73
    %985 = vmatprep.subr.mxu0 0.0
    %986 = vmatpush1.msra.mxu0 0.0
    %987 = vmatprep.subr.mxu0 0.0
    %988 = vmatpush1.msra.mxu0 0.0
    %989 = vmatprep.subr.mxu0 0.0
    %990 = vmatpush1.msra.mxu0 0.0
    %991 = vmatprep.subr.mxu0 0.0
    %992 = vmatpush1.msra.mxu0 0.0
    %993 = vmatprep.subr.mxu0 0.0
    %994 = vmatpush1.msra.mxu0 0.0
    %995 = vmatprep.subr.mxu0 0.0
    %996 = vmatpush1.msra.mxu0 0.0
    %997 = vmatprep.subr.mxu0 0.0
    %998 = vmatpush1.msra.mxu0 0.0
    %999 = vmatprep.subr.mxu0 0.0
    %1000 = vmatpush1.msra.mxu0 0.0
    %1001 = vmatprep.subr.mxu0 0.0
    %1002 = vmatpush1.msra.mxu0 0.0
    %1003 = vmatprep.subr.mxu0 0.0
    %1004 = vmatpush1.msra.mxu0 0.0
    %1005 = vmatprep.subr.mxu0 0.0
    %1006 = vmatpush1.msra.mxu0 0.0
    %1007 = vmatprep.subr.mxu0 0.0
    %1008 = vmatpush1.msra.mxu0 0.0
    %1009 = vmatprep.subr.mxu0 0.0
    %1010 = vmatpush1.msra.mxu0 0.0
    %1011 = vmatprep.subr.mxu0 0.0
    %1012 = vmatpush1.msra.mxu0 0.0
    %1013 = vmatprep.subr.mxu0 0.0
    %1014 = vmatpush1.msra.mxu0 0.0
    %1015 = vmatprep.subr.mxu0 0.0
    %1016 = vmatpush1.msra.mxu0 0.0
    %1017 = vmatprep.subr.mxu0 0.0
    %1018 = vmatpush1.msra.mxu0 0.0
    %1019 = vmatprep.subr.mxu0 0.0
    %1020 = vmatpush1.msra.mxu0 0.0
    %1021 = vmatprep.subr.mxu0 0.0
    %1022 = vmatpush1.msra.mxu0 0.0
    %1023 = vmatprep.subr.mxu0 0.0
    %1024 = vmatpush1.msra.mxu0 0.0
    %1025 = vmatprep.subr.mxu0 0.0
    %1026 = vmatpush1.msra.mxu0 0.0
    %1027 = vmatprep.subr.mxu0 0.0
    %1028 = vmatpush1.msra.mxu0 0.0
    %1029 = vmatprep.subr.mxu0 0.0
    %1030 = vmatpush1.msra.mxu0 0.0
    %1031 = vmatprep.subr.mxu0 0.0
    %1032 = vmatpush1.msra.mxu0 0.0
    %1033 = vmatprep.mubr.f32.mxu0 0.0
    %1034 = vmatmul.mubr.f32.gmra.mrb[0].mxu0 %v967
    %v1035 = vpop.f32.mrb[0].mxu0
    %v1036 = vadd.f32 %v464, %v1035
    %v1037 = vpop.f32.mrb[0].mxu0
    %1038 = vdwg.mxu0
    %v1039 = vxor.u32 %v1036, 2147483648
    %v1040 = vmul.f32 %v1039, 1.442695
    %v1041 = vpow.pop %v1040
    %v1042 = vadd.f32 %v1041, 1.0
    %v1043 = vrcp.pop %v1042
    %v1044 = vmul.f32 1.0, %v1043
    %v1045 = vtanh.pop %v1036
    %v1046 = vmul.f32 %v1044, %v806
    %1048 = vrot.lane.b32.xlu0 %v1045, 32
    %v1049 = vpop.permute.xlu0 %1048
    %v1051 = vmul.f32 %v1044, %v1049
    %1053 = vrot.lane.b32.xlu0 %v1051, 32
    %v1054 = vpop.permute.xlu0 %1053
    %v1056 = vadd.f32 %v1046, %v1054
    %v1057 = vtanh.pop %v1056
    %1059 = vrot.lane.b32.xlu0 %v1057, 32
    %v1060 = vpop.permute.xlu0 %1059
    %v1062 = vmul.f32 %v1044, %v1060
    %v1065 = vrot.slane %v951, 3
    %v1066 = vrot.slane %v952, 2
    %v1067 = vsel %vm322, %v1066, %v1065
    %1068 = vrot.lane.b32.xlu0 %v1067, 64
    %v1069 = vpop.permute.xlu0 %1068
    %v1070 = vsel %vm191, %v1069, 0
    %1072 = vmatprep.subr.mxu0 0.0
    %1073 = vmatpush1.msra.mxu0 %v62
    %1074 = vmatprep.subr.mxu0 0.0
    %1075 = vmatpush1.msra.mxu0 %v63
    %1076 = vmatprep.subr.mxu0 0.0
    %1077 = vmatpush1.msra.mxu0 %v64
    %1078 = vmatprep.subr.mxu0 0.0
    %1079 = vmatpush1.msra.mxu0 %v65
    %1080 = vmatprep.subr.mxu0 0.0
    %1081 = vmatpush1.msra.mxu0 0.0
    %1082 = vmatprep.subr.mxu0 0.0
    %1083 = vmatpush1.msra.mxu0 0.0
    %1084 = vmatprep.subr.mxu0 0.0
    %1085 = vmatpush1.msra.mxu0 0.0
    %1086 = vmatprep.subr.mxu0 0.0
    %1087 = vmatpush1.msra.mxu0 0.0
    %1088 = vmatprep.subr.mxu0 0.0
    %1089 = vmatpush1.msra.mxu0 0.0
    %1090 = vmatprep.subr.mxu0 0.0
    %1091 = vmatpush1.msra.mxu0 0.0
    %1092 = vmatprep.subr.mxu0 0.0
    %1093 = vmatpush1.msra.mxu0 0.0
    %1094 = vmatprep.subr.mxu0 0.0
    %1095 = vmatpush1.msra.mxu0 0.0
    %1096 = vmatprep.subr.mxu0 0.0
    %1097 = vmatpush1.msra.mxu0 0.0
    %1098 = vmatprep.subr.mxu0 0.0
    %1099 = vmatpush1.msra.mxu0 0.0
    %1100 = vmatprep.subr.mxu0 0.0
    %1101 = vmatpush1.msra.mxu0 0.0
    %1102 = vmatprep.subr.mxu0 0.0
    %1103 = vmatpush1.msra.mxu0 0.0
    %1104 = vmatprep.subr.mxu0 0.0
    %1105 = vmatpush1.msra.mxu0 0.0
    %1106 = vmatprep.subr.mxu0 0.0
    %1107 = vmatpush1.msra.mxu0 0.0
    %1108 = vmatprep.subr.mxu0 0.0
    %1109 = vmatpush1.msra.mxu0 0.0
    %1110 = vmatprep.subr.mxu0 0.0
    %1111 = vmatpush1.msra.mxu0 0.0
    %1112 = vmatprep.subr.mxu0 0.0
    %1113 = vmatpush1.msra.mxu0 0.0
    %1114 = vmatprep.subr.mxu0 0.0
    %1115 = vmatpush1.msra.mxu0 0.0
    %1116 = vmatprep.subr.mxu0 0.0
    %1117 = vmatpush1.msra.mxu0 0.0
    %1118 = vmatprep.subr.mxu0 0.0
    %1119 = vmatpush1.msra.mxu0 0.0
    %1120 = vmatprep.subr.mxu0 0.0
    %1121 = vmatpush1.msra.mxu0 0.0
    %1122 = vmatprep.subr.mxu0 0.0
    %1123 = vmatpush1.msra.mxu0 0.0
    %1124 = vmatprep.subr.mxu0 0.0
    %1125 = vmatpush1.msra.mxu0 0.0
    %1126 = vmatprep.subr.mxu0 0.0
    %1127 = vmatpush1.msra.mxu0 0.0
    %1128 = vmatprep.subr.mxu0 0.0
    %1129 = vmatpush1.msra.mxu0 0.0
    %1130 = vmatprep.subr.mxu0 0.0
    %1131 = vmatpush1.msra.mxu0 0.0
    %1132 = vmatprep.subr.mxu0 0.0
    %1133 = vmatpush1.msra.mxu0 0.0
    %1134 = vmatprep.subr.mxu0 0.0
    %1135 = vmatpush1.msra.mxu0 0.0
    %1136 = vmatprep.mubr.f32.mxu0 0.0
    %1137 = vmatmul.mubr.f32.gmra.mrb[0].mxu0 %v1070
    %v1138 = vpop.f32.mrb[0].mxu0
    %v1139 = vadd.f32 0.0, %v1138
    %v1140 = vpop.f32.mrb[0].mxu0
    %1141 = vdwg.mxu0
    %v1143 = vrot.slane %v1139, 4
    %v1144 = vrot.slane %v1139, 5
    %v1147 = vadd.f32 %v189, %v1143
    %v1148 = vadd.f32 %v190, %v1144
    %v1149 = vxor.u32 %v1147, 2147483648
    %v1150 = vxor.u32 %v1148, 2147483648
    %v1151 = vmul.f32 %v1149, 1.442695
    %v1152 = vpow.pop %v1151
    %v1153 = vmul.f32 %v1150, 1.442695
    %v1154 = vpow.pop %v1153
    %v1155 = vadd.f32 %v1152, 1.0
    %v1156 = vadd.f32 %v1154, 1.0
    %v1157 = vrcp.pop %v1155
    %v1158 = vmul.f32 1.0, %v1157
    %v1159 = vrcp.pop %v1156
    %v1160 = vmul.f32 1.0, %v1159
    %v1161 = vtanh.pop %v1147
    %v1162 = vtanh.pop %v1148
    %v1165 = vrot.slane %v939, 7
    %v1166 = vrot.slane %v940, 7
    %v1169 = vmul.f32 %v1158, %v1165
    %v1170 = vmul.f32 %v1160, %v1166
    %1173 = vrot.lane.b32.xlu0 %v1161, 32
    %v1174 = vpop.permute.xlu0 %1173
    %1175 = vrot.lane.b32.xlu0 %v1162, 32
    %v1176 = vpop.permute.xlu0 %1175
    %v1179 = vmul.f32 %v1158, %v1174
    %v1180 = vmul.f32 %v1160, %v1176
    %1183 = vrot.lane.b32.xlu0 %v1179, 32
    %v1184 = vpop.permute.xlu0 %1183
    %1185 = vrot.lane.b32.xlu0 %v1180, 32
    %v1186 = vpop.permute.xlu0 %1185
    %v1189 = vadd.f32 %v1169, %v1184
    %v1190 = vadd.f32 %v1170, %v1186
    %v1191 = vtanh.pop %v1189
    %v1192 = vtanh.pop %v1190
    %1195 = vrot.lane.b32.xlu0 %v1191, 32
    %v1196 = vpop.permute.xlu0 %1195
    %1197 = vrot.lane.b32.xlu0 %v1192, 32
    %v1198 = vpop.permute.xlu0 %1197
    %v1201 = vmul.f32 %v1158, %v1196
    %v1202 = vmul.f32 %v1160, %v1198
    %v1203 = vrot.slane %v952, 7
    %vm1204 = vcmask 1044484
    %v1205 = vsel %vm1204, %v1203, %v951
    %1206 = vrot.lane.b32.xlu0 %v1205, 64
    %v1207 = vpop.permute.xlu0 %1206
    %v1210 = vrot.slane %v1062, 5
    %1211 = vrot.lane.b32.xlu0 %v1210, 96
    %v1212 = vpop.permute.xlu0 %1211
    %v1214 = vsel %vm191, %v1207, %v1212
    %v1216 = vrot.slane %v1214, 3
    %v1217 = vsel %vm466, %v1216, 0
    %1219 = vmatprep.subr.mxu0 0.0
    %1220 = vmatpush1.msra.mxu0 %v66
    %1221 = vmatprep.subr.mxu0 0.0
    %1222 = vmatpush1.msra.mxu0 %v67
    %1223 = vmatprep.subr.mxu0 0.0
    %1224 = vmatpush1.msra.mxu0 %v68
    %1225 = vmatprep.subr.mxu0 0.0
    %1226 = vmatpush1.msra.mxu0 %v69
    %1227 = vmatprep.subr.mxu0 0.0
    %1228 = vmatpush1.msra.mxu0 %v70
    %1229 = vmatprep.subr.mxu0 0.0
    %1230 = vmatpush1.msra.mxu0 %v71
    %1231 = vmatprep.subr.mxu0 0.0
    %1232 = vmatpush1.msra.mxu0 %v72
    %1233 = vmatprep.subr.mxu0 0.0
    %1234 = vmatpush1.msra.mxu0 %v73
    %1235 = vmatprep.subr.mxu0 0.0
    %1236 = vmatpush1.msra.mxu0 0.0
    %1237 = vmatprep.subr.mxu0 0.0
    %1238 = vmatpush1.msra.mxu0 0.0
    %1239 = vmatprep.subr.mxu0 0.0
    %1240 = vmatpush1.msra.mxu0 0.0
    %1241 = vmatprep.subr.mxu0 0.0
    %1242 = vmatpush1.msra.mxu0 0.0
    %1243 = vmatprep.subr.mxu0 0.0
    %1244 = vmatpush1.msra.mxu0 0.0
    %1245 = vmatprep.subr.mxu0 0.0
    %1246 = vmatpush1.msra.mxu0 0.0
    %1247 = vmatprep.subr.mxu0 0.0
    %1248 = vmatpush1.msra.mxu0 0.0
    %1249 = vmatprep.subr.mxu0 0.0
    %1250 = vmatpush1.msra.mxu0 0.0
    %1251 = vmatprep.subr.mxu0 0.0
    %1252 = vmatpush1.msra.mxu0 0.0
    %1253 = vmatprep.subr.mxu0 0.0
    %1254 = vmatpush1.msra.mxu0 0.0
    %1255 = vmatprep.subr.mxu0 0.0
    %1256 = vmatpush1.msra.mxu0 0.0
    %1257 = vmatprep.subr.mxu0 0.0
    %1258 = vmatpush1.msra.mxu0 0.0
    %1259 = vmatprep.subr.mxu0 0.0
    %1260 = vmatpush1.msra.mxu0 0.0
    %1261 = vmatprep.subr.mxu0 0.0
    %1262 = vmatpush1.msra.mxu0 0.0
    %1263 = vmatprep.subr.mxu0 0.0
    %1264 = vmatpush1.msra.mxu0 0.0
    %1265 = vmatprep.subr.mxu0 0.0
    %1266 = vmatpush1.msra.mxu0 0.0
    %1267 = vmatprep.subr.mxu0 0.0
    %1268 = vmatpush1.msra.mxu0 0.0
    %1269 = vmatprep.subr.mxu0 0.0
    %1270 = vmatpush1.msra.mxu0 0.0
    %1271 = vmatprep.subr.mxu0 0.0
    %1272 = vmatpush1.msra.mxu0 0.0
    %1273 = vmatprep.subr.mxu0 0.0
    %1274 = vmatpush1.msra.mxu0 0.0
    %1275 = vmatprep.subr.mxu0 0.0
    %1276 = vmatpush1.msra.mxu0 0.0
    %1277 = vmatprep.subr.mxu0 0.0
    %1278 = vmatpush1.msra.mxu0 0.0
    %1279 = vmatprep.subr.mxu0 0.0
    %1280 = vmatpush1.msra.mxu0 0.0
    %1281 = vmatprep.subr.mxu0 0.0
    %1282 = vmatpush1.msra.mxu0 0.0
    %1283 = vmatprep.mubr.f32.mxu0 0.0
    %1284 = vmatmul.mubr.f32.gmra.mrb[0].mxu0 %v1217
    %v1285 = vpop.f32.mrb[0].mxu0
    %v1286 = vadd.f32 %v464, %v1285
    %v1287 = vpop.f32.mrb[0].mxu0
    %1288 = vdwg.mxu0
    %v1289 = vxor.u32 %v1286, 2147483648
    %v1290 = vmul.f32 %v1289, 1.442695
    %v1291 = vpow.pop %v1290
    %v1292 = vadd.f32 %v1291, 1.0
    %v1293 = vrcp.pop %v1292
    %v1294 = vmul.f32 1.0, %v1293
    %v1295 = vtanh.pop %v1286
    %v1296 = vmul.f32 %v1294, %v1056
    %1298 = vrot.lane.b32.xlu0 %v1295, 32
    %v1299 = vpop.permute.xlu0 %1298
    %v1301 = vmul.f32 %v1294, %v1299
    %1303 = vrot.lane.b32.xlu0 %v1301, 32
    %v1304 = vpop.permute.xlu0 %1303
    %v1306 = vadd.f32 %v1296, %v1304
    %v1307 = vtanh.pop %v1306
    %1309 = vrot.lane.b32.xlu0 %v1307, 32
    %v1310 = vpop.permute.xlu0 %1309
    %v1312 = vmul.f32 %v1294, %v1310
    %v1315 = vrot.slane %v1201, 4
    %v1316 = vrot.slane %v1202, 3
    %v1317 = vsel %vm322, %v1316, %v1315
    %1318 = vrot.lane.b32.xlu0 %v1317, 64
    %v1319 = vpop.permute.xlu0 %1318
    %v1320 = vsel %vm191, %v1319, 0
    %1322 = vmatprep.subr.mxu0 0.0
    %1323 = vmatpush1.msra.mxu0 %v62
    %1324 = vmatprep.subr.mxu0 0.0
    %1325 = vmatpush1.msra.mxu0 %v63
    %1326 = vmatprep.subr.mxu0 0.0
    %1327 = vmatpush1.msra.mxu0 %v64
    %1328 = vmatprep.subr.mxu0 0.0
    %1329 = vmatpush1.msra.mxu0 %v65
    %1330 = vmatprep.subr.mxu0 0.0
    %1331 = vmatpush1.msra.mxu0 0.0
    %1332 = vmatprep.subr.mxu0 0.0
    %1333 = vmatpush1.msra.mxu0 0.0
    %1334 = vmatprep.subr.mxu0 0.0
    %1335 = vmatpush1.msra.mxu0 0.0
    %1336 = vmatprep.subr.mxu0 0.0
    %1337 = vmatpush1.msra.mxu0 0.0
    %1338 = vmatprep.subr.mxu0 0.0
    %1339 = vmatpush1.msra.mxu0 0.0
    %1340 = vmatprep.subr.mxu0 0.0
    %1341 = vmatpush1.msra.mxu0 0.0
    %1342 = vmatprep.subr.mxu0 0.0
    %1343 = vmatpush1.msra.mxu0 0.0
    %1344 = vmatprep.subr.mxu0 0.0
    %1345 = vmatpush1.msra.mxu0 0.0
    %1346 = vmatprep.subr.mxu0 0.0
    %1347 = vmatpush1.msra.mxu0 0.0
    %1348 = vmatprep.subr.mxu0 0.0
    %1349 = vmatpush1.msra.mxu0 0.0
    %1350 = vmatprep.subr.mxu0 0.0
    %1351 = vmatpush1.msra.mxu0 0.0
    %1352 = vmatprep.subr.mxu0 0.0
    %1353 = vmatpush1.msra.mxu0 0.0
    %1354 = vmatprep.subr.mxu0 0.0
    %1355 = vmatpush1.msra.mxu0 0.0
    %1356 = vmatprep.subr.mxu0 0.0
    %1357 = vmatpush1.msra.mxu0 0.0
    %1358 = vmatprep.subr.mxu0 0.0
    %1359 = vmatpush1.msra.mxu0 0.0
    %1360 = vmatprep.subr.mxu0 0.0
    %1361 = vmatpush1.msra.mxu0 0.0
    %1362 = vmatprep.subr.mxu0 0.0
    %1363 = vmatpush1.msra.mxu0 0.0
    %1364 = vmatprep.subr.mxu0 0.0
    %1365 = vmatpush1.msra.mxu0 0.0
    %1366 = vmatprep.subr.mxu0 0.0
    %1367 = vmatpush1.msra.mxu0 0.0
    %1368 = vmatprep.subr.mxu0 0.0
    %1369 = vmatpush1.msra.mxu0 0.0
    %1370 = vmatprep.subr.mxu0 0.0
    %1371 = vmatpush1.msra.mxu0 0.0
    %1372 = vmatprep.subr.mxu0 0.0
    %1373 = vmatpush1.msra.mxu0 0.0
    %1374 = vmatprep.subr.mxu0 0.0
    %1375 = vmatpush1.msra.mxu0 0.0
    %1376 = vmatprep.subr.mxu0 0.0
    %1377 = vmatpush1.msra.mxu0 0.0
    %1378 = vmatprep.subr.mxu0 0.0
    %1379 = vmatpush1.msra.mxu0 0.0
    %1380 = vmatprep.subr.mxu0 0.0
    %1381 = vmatpush1.msra.mxu0 0.0
    %1382 = vmatprep.subr.mxu0 0.0
    %1383 = vmatpush1.msra.mxu0 0.0
    %1384 = vmatprep.subr.mxu0 0.0
    %1385 = vmatpush1.msra.mxu0 0.0
    %1386 = vmatprep.mubr.f32.mxu0 0.0
    %1387 = vmatmul.mubr.f32.gmra.mrb[0].mxu0 %v1320
    %v1388 = vpop.f32.mrb[0].mxu0
    %v1389 = vadd.f32 0.0, %v1388
    %v1390 = vpop.f32.mrb[0].mxu0
    %1391 = vdwg.mxu0
    %v1393 = vrot.slane %v1389, 3
    %v1394 = vrot.slane %v1389, 4
    %v1397 = vadd.f32 %v189, %v1393
    %v1398 = vadd.f32 %v190, %v1394
    %v1399 = vxor.u32 %v1397, 2147483648
    %v1400 = vxor.u32 %v1398, 2147483648
    %v1401 = vmul.f32 %v1399, 1.442695
    %v1402 = vpow.pop %v1401
    %v1403 = vmul.f32 %v1400, 1.442695
    %v1404 = vpow.pop %v1403
    %v1405 = vadd.f32 %v1402, 1.0
    %v1406 = vadd.f32 %v1404, 1.0
    %v1407 = vrcp.pop %v1405
    %v1408 = vmul.f32 1.0, %v1407
    %v1409 = vrcp.pop %v1406
    %v1410 = vmul.f32 1.0, %v1409
    %v1411 = vtanh.pop %v1397
    %v1412 = vtanh.pop %v1398
    %v1415 = vrot.slane %v1189, 7
    %v1416 = vrot.slane %v1190, 7
    %v1419 = vmul.f32 %v1408, %v1415
    %v1420 = vmul.f32 %v1410, %v1416
    %1423 = vrot.lane.b32.xlu0 %v1411, 32
    %v1424 = vpop.permute.xlu0 %1423
    %1425 = vrot.lane.b32.xlu0 %v1412, 32
    %v1426 = vpop.permute.xlu0 %1425
    %v1429 = vmul.f32 %v1408, %v1424
    %v1430 = vmul.f32 %v1410, %v1426
    %1433 = vrot.lane.b32.xlu0 %v1429, 32
    %v1434 = vpop.permute.xlu0 %1433
    %1435 = vrot.lane.b32.xlu0 %v1430, 32
    %v1436 = vpop.permute.xlu0 %1435
    %v1439 = vadd.f32 %v1419, %v1434
    %v1440 = vadd.f32 %v1420, %v1436
    %v1441 = vtanh.pop %v1439
    %v1442 = vtanh.pop %v1440
    %1445 = vrot.lane.b32.xlu0 %v1441, 32
    %v1446 = vpop.permute.xlu0 %1445
    %1447 = vrot.lane.b32.xlu0 %v1442, 32
    %v1448 = vpop.permute.xlu0 %1447
    %v1451 = vmul.f32 %v1408, %v1446
    %v1452 = vmul.f32 %v1410, %v1448
    %v1453 = vrot.slane %v1202, 7
    %vm1454 = vcmask 1045509
    %v1455 = vsel %vm1454, %v1453, %v1201
    %1456 = vrot.lane.b32.xlu0 %v1455, 64
    %v1457 = vpop.permute.xlu0 %1456
    %v1460 = vrot.slane %v1312, 4
    %1461 = vrot.lane.b32.xlu0 %v1460, 96
    %v1462 = vpop.permute.xlu0 %1461
    %v1464 = vsel %vm191, %v1457, %v1462
    %v1466 = vrot.slane %v1464, 4
    %v1467 = vsel %vm466, %v1466, 0
    %1469 = vmatprep.subr.mxu0 0.0
    %1470 = vmatpush1.msra.mxu0 %v66
    %1471 = vmatprep.subr.mxu0 0.0
    %1472 = vmatpush1.msra.mxu0 %v67
    %1473 = vmatprep.subr.mxu0 0.0
    %1474 = vmatpush1.msra.mxu0 %v68
    %1475 = vmatprep.subr.mxu0 0.0
    %1476 = vmatpush1.msra.mxu0 %v69
    %1477 = vmatprep.subr.mxu0 0.0
    %1478 = vmatpush1.msra.mxu0 %v70
    %1479 = vmatprep.subr.mxu0 0.0
    %1480 = vmatpush1.msra.mxu0 %v71
    %1481 = vmatprep.subr.mxu0 0.0
    %1482 = vmatpush1.msra.mxu0 %v72
    %1483 = vmatprep.subr.mxu0 0.0
    %1484 = vmatpush1.msra.mxu0 %v73
    %1485 = vmatprep.subr.mxu0 0.0
    %1486 = vmatpush1.msra.mxu0 0.0
    %1487 = vmatprep.subr.mxu0 0.0
    %1488 = vmatpush1.msra.mxu0 0.0
    %1489 = vmatprep.subr.mxu0 0.0
    %1490 = vmatpush1.msra.mxu0 0.0
    %1491 = vmatprep.subr.mxu0 0.0
    %1492 = vmatpush1.msra.mxu0 0.0
    %1493 = vmatprep.subr.mxu0 0.0
    %1494 = vmatpush1.msra.mxu0 0.0
    %1495 = vmatprep.subr.mxu0 0.0
    %1496 = vmatpush1.msra.mxu0 0.0
    %1497 = vmatprep.subr.mxu0 0.0
    %1498 = vmatpush1.msra.mxu0 0.0
    %1499 = vmatprep.subr.mxu0 0.0
    %1500 = vmatpush1.msra.mxu0 0.0
    %1501 = vmatprep.subr.mxu0 0.0
    %1502 = vmatpush1.msra.mxu0 0.0
    %1503 = vmatprep.subr.mxu0 0.0
    %1504 = vmatpush1.msra.mxu0 0.0
    %1505 = vmatprep.subr.mxu0 0.0
    %1506 = vmatpush1.msra.mxu0 0.0
    %1507 = vmatprep.subr.mxu0 0.0
    %1508 = vmatpush1.msra.mxu0 0.0
    %1509 = vmatprep.subr.mxu0 0.0
    %1510 = vmatpush1.msra.mxu0 0.0
    %1511 = vmatprep.subr.mxu0 0.0
    %1512 = vmatpush1.msra.mxu0 0.0
    %1513 = vmatprep.subr.mxu0 0.0
    %1514 = vmatpush1.msra.mxu0 0.0
    %1515 = vmatprep.subr.mxu0 0.0
    %1516 = vmatpush1.msra.mxu0 0.0
    %1517 = vmatprep.subr.mxu0 0.0
    %1518 = vmatpush1.msra.mxu0 0.0
    %1519 = vmatprep.subr.mxu0 0.0
    %1520 = vmatpush1.msra.mxu0 0.0
    %1521 = vmatprep.subr.mxu0 0.0
    %1522 = vmatpush1.msra.mxu0 0.0
    %1523 = vmatprep.subr.mxu0 0.0
    %1524 = vmatpush1.msra.mxu0 0.0
    %1525 = vmatprep.subr.mxu0 0.0
    %1526 = vmatpush1.msra.mxu0 0.0
    %1527 = vmatprep.subr.mxu0 0.0
    %1528 = vmatpush1.msra.mxu0 0.0
    %1529 = vmatprep.subr.mxu0 0.0
    %1530 = vmatpush1.msra.mxu0 0.0
    %1531 = vmatprep.subr.mxu0 0.0
    %1532 = vmatpush1.msra.mxu0 0.0
    %1533 = vmatprep.mubr.f32.mxu0 0.0
    %1534 = vmatmul.mubr.f32.gmra.mrb[0].mxu0 %v1467
    %v1535 = vpop.f32.mrb[0].mxu0
    %v1536 = vadd.f32 %v464, %v1535
    %v1537 = vpop.f32.mrb[0].mxu0
    %1538 = vdwg.mxu0
    %v1539 = vxor.u32 %v1536, 2147483648
    %v1540 = vmul.f32 %v1539, 1.442695
    %v1541 = vpow.pop %v1540
    %v1542 = vadd.f32 %v1541, 1.0
    %v1543 = vrcp.pop %v1542
    %v1544 = vmul.f32 1.0, %v1543
    %v1545 = vtanh.pop %v1536
    %v1546 = vmul.f32 %v1544, %v1306
    %1548 = vrot.lane.b32.xlu0 %v1545, 32
    %v1549 = vpop.permute.xlu0 %1548
    %v1551 = vmul.f32 %v1544, %v1549
    %1553 = vrot.lane.b32.xlu0 %v1551, 32
    %v1554 = vpop.permute.xlu0 %1553
    %v1556 = vadd.f32 %v1546, %v1554
    %v1557 = vtanh.pop %v1556
    %1559 = vrot.lane.b32.xlu0 %v1557, 32
    %v1560 = vpop.permute.xlu0 %1559
    %v1562 = vmul.f32 %v1544, %v1560
    %v1565 = vrot.slane %v1451, 5
    %v1566 = vrot.slane %v1452, 4
    %v1567 = vsel %vm322, %v1566, %v1565
    %1568 = vrot.lane.b32.xlu0 %v1567, 64
    %v1569 = vpop.permute.xlu0 %1568
    %v1570 = vsel %vm191, %v1569, 0
    %1572 = vmatprep.subr.mxu0 0.0
    %1573 = vmatpush1.msra.mxu0 %v62
    %1574 = vmatprep.subr.mxu0 0.0
    %1575 = vmatpush1.msra.mxu0 %v63
    %1576 = vmatprep.subr.mxu0 0.0
    %1577 = vmatpush1.msra.mxu0 %v64
    %1578 = vmatprep.subr.mxu0 0.0
    %1579 = vmatpush1.msra.mxu0 %v65
    %1580 = vmatprep.subr.mxu0 0.0
    %1581 = vmatpush1.msra.mxu0 0.0
    %1582 = vmatprep.subr.mxu0 0.0
    %1583 = vmatpush1.msra.mxu0 0.0
    %1584 = vmatprep.subr.mxu0 0.0
    %1585 = vmatpush1.msra.mxu0 0.0
    %1586 = vmatprep.subr.mxu0 0.0
    %1587 = vmatpush1.msra.mxu0 0.0
    %1588 = vmatprep.subr.mxu0 0.0
    %1589 = vmatpush1.msra.mxu0 0.0
    %1590 = vmatprep.subr.mxu0 0.0
    %1591 = vmatpush1.msra.mxu0 0.0
    %1592 = vmatprep.subr.mxu0 0.0
    %1593 = vmatpush1.msra.mxu0 0.0
    %1594 = vmatprep.subr.mxu0 0.0
    %1595 = vmatpush1.msra.mxu0 0.0
    %1596 = vmatprep.subr.mxu0 0.0
    %1597 = vmatpush1.msra.mxu0 0.0
    %1598 = vmatprep.subr.mxu0 0.0
    %1599 = vmatpush1.msra.mxu0 0.0
    %1600 = vmatprep.subr.mxu0 0.0
    %1601 = vmatpush1.msra.mxu0 0.0
    %1602 = vmatprep.subr.mxu0 0.0
    %1603 = vmatpush1.msra.mxu0 0.0
    %1604 = vmatprep.subr.mxu0 0.0
    %1605 = vmatpush1.msra.mxu0 0.0
    %1606 = vmatprep.subr.mxu0 0.0
    %1607 = vmatpush1.msra.mxu0 0.0
    %1608 = vmatprep.subr.mxu0 0.0
    %1609 = vmatpush1.msra.mxu0 0.0
    %1610 = vmatprep.subr.mxu0 0.0
    %1611 = vmatpush1.msra.mxu0 0.0
    %1612 = vmatprep.subr.mxu0 0.0
    %1613 = vmatpush1.msra.mxu0 0.0
    %1614 = vmatprep.subr.mxu0 0.0
    %1615 = vmatpush1.msra.mxu0 0.0
    %1616 = vmatprep.subr.mxu0 0.0
    %1617 = vmatpush1.msra.mxu0 0.0
    %1618 = vmatprep.subr.mxu0 0.0
    %1619 = vmatpush1.msra.mxu0 0.0
    %1620 = vmatprep.subr.mxu0 0.0
    %1621 = vmatpush1.msra.mxu0 0.0
    %1622 = vmatprep.subr.mxu0 0.0
    %1623 = vmatpush1.msra.mxu0 0.0
    %1624 = vmatprep.subr.mxu0 0.0
    %1625 = vmatpush1.msra.mxu0 0.0
    %1626 = vmatprep.subr.mxu0 0.0
    %1627 = vmatpush1.msra.mxu0 0.0
    %1628 = vmatprep.subr.mxu0 0.0
    %1629 = vmatpush1.msra.mxu0 0.0
    %1630 = vmatprep.subr.mxu0 0.0
    %1631 = vmatpush1.msra.mxu0 0.0
    %1632 = vmatprep.subr.mxu0 0.0
    %1633 = vmatpush1.msra.mxu0 0.0
    %1634 = vmatprep.subr.mxu0 0.0
    %1635 = vmatpush1.msra.mxu0 0.0
    %1636 = vmatprep.mubr.f32.mxu0 0.0
    %1637 = vmatmul.mubr.f32.gmra.mrb[0].mxu0 %v1570
    %v1638 = vpop.f32.mrb[0].mxu0
    %v1639 = vadd.f32 0.0, %v1638
    %v1640 = vpop.f32.mrb[0].mxu0
    %1641 = vdwg.mxu0
    %v1643 = vrot.slane %v1639, 2
    %v1644 = vrot.slane %v1639, 3
    %v1647 = vadd.f32 %v189, %v1643
    %v1648 = vadd.f32 %v190, %v1644
    %v1649 = vxor.u32 %v1647, 2147483648
    %v1650 = vxor.u32 %v1648, 2147483648
    %v1651 = vmul.f32 %v1649, 1.442695
    %v1652 = vpow.pop %v1651
    %v1653 = vmul.f32 %v1650, 1.442695
    %v1654 = vpow.pop %v1653
    %v1655 = vadd.f32 %v1652, 1.0
    %v1656 = vadd.f32 %v1654, 1.0
    %v1657 = vrcp.pop %v1655
    %v1658 = vmul.f32 1.0, %v1657
    %v1659 = vrcp.pop %v1656
    %v1660 = vmul.f32 1.0, %v1659
    %v1661 = vtanh.pop %v1647
    %v1662 = vtanh.pop %v1648
    %v1665 = vrot.slane %v1439, 7
    %v1666 = vrot.slane %v1440, 7
    %v1669 = vmul.f32 %v1658, %v1665
    %v1670 = vmul.f32 %v1660, %v1666
    %1673 = vrot.lane.b32.xlu0 %v1661, 32
    %v1674 = vpop.permute.xlu0 %1673
    %1675 = vrot.lane.b32.xlu0 %v1662, 32
    %v1676 = vpop.permute.xlu0 %1675
    %v1679 = vmul.f32 %v1658, %v1674
    %v1680 = vmul.f32 %v1660, %v1676
    %1683 = vrot.lane.b32.xlu0 %v1679, 32
    %v1684 = vpop.permute.xlu0 %1683
    %1685 = vrot.lane.b32.xlu0 %v1680, 32
    %v1686 = vpop.permute.xlu0 %1685
    %v1689 = vadd.f32 %v1669, %v1684
    %v1690 = vadd.f32 %v1670, %v1686
    %v1691 = vtanh.pop %v1689
    %v1692 = vtanh.pop %v1690
    %1695 = vrot.lane.b32.xlu0 %v1691, 32
    %v1696 = vpop.permute.xlu0 %1695
    %1697 = vrot.lane.b32.xlu0 %v1692, 32
    %v1698 = vpop.permute.xlu0 %1697
    %v1701 = vmul.f32 %v1658, %v1696
    %v1702 = vmul.f32 %v1660, %v1698
    %v1703 = vrot.slane %v1452, 7
    %vm1704 = vcmask 1046534
    %v1705 = vsel %vm1704, %v1703, %v1451
    %1706 = vrot.lane.b32.xlu0 %v1705, 64
    %v1707 = vpop.permute.xlu0 %1706
    %v1710 = vrot.slane %v1562, 3
    %1711 = vrot.lane.b32.xlu0 %v1710, 96
    %v1712 = vpop.permute.xlu0 %1711
    %v1714 = vsel %vm191, %v1707, %v1712
    %v1716 = vrot.slane %v1714, 5
    %v1717 = vsel %vm466, %v1716, 0
    %1719 = vmatprep.subr.mxu0 0.0
    %1720 = vmatpush1.msra.mxu0 %v66
    %1721 = vmatprep.subr.mxu0 0.0
    %1722 = vmatpush1.msra.mxu0 %v67
    %1723 = vmatprep.subr.mxu0 0.0
    %1724 = vmatpush1.msra.mxu0 %v68
    %1725 = vmatprep.subr.mxu0 0.0
    %1726 = vmatpush1.msra.mxu0 %v69
    %1727 = vmatprep.subr.mxu0 0.0
    %1728 = vmatpush1.msra.mxu0 %v70
    %1729 = vmatprep.subr.mxu0 0.0
    %1730 = vmatpush1.msra.mxu0 %v71
    %1731 = vmatprep.subr.mxu0 0.0
    %1732 = vmatpush1.msra.mxu0 %v72
    %1733 = vmatprep.subr.mxu0 0.0
    %1734 = vmatpush1.msra.mxu0 %v73
    %1735 = vmatprep.subr.mxu0 0.0
    %1736 = vmatpush1.msra.mxu0 0.0
    %1737 = vmatprep.subr.mxu0 0.0
    %1738 = vmatpush1.msra.mxu0 0.0
    %1739 = vmatprep.subr.mxu0 0.0
    %1740 = vmatpush1.msra.mxu0 0.0
    %1741 = vmatprep.subr.mxu0 0.0
    %1742 = vmatpush1.msra.mxu0 0.0
    %1743 = vmatprep.subr.mxu0 0.0
    %1744 = vmatpush1.msra.mxu0 0.0
    %1745 = vmatprep.subr.mxu0 0.0
    %1746 = vmatpush1.msra.mxu0 0.0
    %1747 = vmatprep.subr.mxu0 0.0
    %1748 = vmatpush1.msra.mxu0 0.0
    %1749 = vmatprep.subr.mxu0 0.0
    %1750 = vmatpush1.msra.mxu0 0.0
    %1751 = vmatprep.subr.mxu0 0.0
    %1752 = vmatpush1.msra.mxu0 0.0
    %1753 = vmatprep.subr.mxu0 0.0
    %1754 = vmatpush1.msra.mxu0 0.0
    %1755 = vmatprep.subr.mxu0 0.0
    %1756 = vmatpush1.msra.mxu0 0.0
    %1757 = vmatprep.subr.mxu0 0.0
    %1758 = vmatpush1.msra.mxu0 0.0
    %1759 = vmatprep.subr.mxu0 0.0
    %1760 = vmatpush1.msra.mxu0 0.0
    %1761 = vmatprep.subr.mxu0 0.0
    %1762 = vmatpush1.msra.mxu0 0.0
    %1763 = vmatprep.subr.mxu0 0.0
    %1764 = vmatpush1.msra.mxu0 0.0
    %1765 = vmatprep.subr.mxu0 0.0
    %1766 = vmatpush1.msra.mxu0 0.0
    %1767 = vmatprep.subr.mxu0 0.0
    %1768 = vmatpush1.msra.mxu0 0.0
    %1769 = vmatprep.subr.mxu0 0.0
    %1770 = vmatpush1.msra.mxu0 0.0
    %1771 = vmatprep.subr.mxu0 0.0
    %1772 = vmatpush1.msra.mxu0 0.0
    %1773 = vmatprep.subr.mxu0 0.0
    %1774 = vmatpush1.msra.mxu0 0.0
    %1775 = vmatprep.subr.mxu0 0.0
    %1776 = vmatpush1.msra.mxu0 0.0
    %1777 = vmatprep.subr.mxu0 0.0
    %1778 = vmatpush1.msra.mxu0 0.0
    %1779 = vmatprep.subr.mxu0 0.0
    %1780 = vmatpush1.msra.mxu0 0.0
    %1781 = vmatprep.subr.mxu0 0.0
    %1782 = vmatpush1.msra.mxu0 0.0
    %1783 = vmatprep.mubr.f32.mxu0 0.0
    %1784 = vmatmul.mubr.f32.gmra.mrb[0].mxu0 %v1717
    %v1785 = vpop.f32.mrb[0].mxu0
    %v1786 = vadd.f32 %v464, %v1785
    %v1787 = vpop.f32.mrb[0].mxu0
    %1788 = vdwg.mxu0
    %v1789 = vxor.u32 %v1786, 2147483648
    %v1790 = vmul.f32 %v1789, 1.442695
    %v1791 = vpow.pop %v1790
    %v1792 = vadd.f32 %v1791, 1.0
    %v1793 = vrcp.pop %v1792
    %v1794 = vmul.f32 1.0, %v1793
    %v1795 = vtanh.pop %v1786
    %v1796 = vmul.f32 %v1794, %v1556
    %1798 = vrot.lane.b32.xlu0 %v1795, 32
    %v1799 = vpop.permute.xlu0 %1798
    %v1801 = vmul.f32 %v1794, %v1799
    %1803 = vrot.lane.b32.xlu0 %v1801, 32
    %v1804 = vpop.permute.xlu0 %1803
    %v1806 = vadd.f32 %v1796, %v1804
    %v1807 = vtanh.pop %v1806
    %1809 = vrot.lane.b32.xlu0 %v1807, 32
    %v1810 = vpop.permute.xlu0 %1809
    %v1812 = vmul.f32 %v1794, %v1810
    %v1815 = vrot.slane %v1701, 6
    %v1816 = vrot.slane %v1702, 5
    %v1817 = vsel %vm322, %v1816, %v1815
    %1818 = vrot.lane.b32.xlu0 %v1817, 64
    %v1819 = vpop.permute.xlu0 %1818
    %v1820 = vsel %vm191, %v1819, 0
    %1822 = vmatprep.subr.mxu0 0.0
    %1823 = vmatpush1.msra.mxu0 %v62
    %1824 = vmatprep.subr.mxu0 0.0
    %1825 = vmatpush1.msra.mxu0 %v63
    %1826 = vmatprep.subr.mxu0 0.0
    %1827 = vmatpush1.msra.mxu0 %v64
    %1828 = vmatprep.subr.mxu0 0.0
    %1829 = vmatpush1.msra.mxu0 %v65
    %1830 = vmatprep.subr.mxu0 0.0
    %1831 = vmatpush1.msra.mxu0 0.0
    %1832 = vmatprep.subr.mxu0 0.0
    %1833 = vmatpush1.msra.mxu0 0.0
    %1834 = vmatprep.subr.mxu0 0.0
    %1835 = vmatpush1.msra.mxu0 0.0
    %1836 = vmatprep.subr.mxu0 0.0
    %1837 = vmatpush1.msra.mxu0 0.0
    %1838 = vmatprep.subr.mxu0 0.0
    %1839 = vmatpush1.msra.mxu0 0.0
    %1840 = vmatprep.subr.mxu0 0.0
    %1841 = vmatpush1.msra.mxu0 0.0
    %1842 = vmatprep.subr.mxu0 0.0
    %1843 = vmatpush1.msra.mxu0 0.0
    %1844 = vmatprep.subr.mxu0 0.0
    %1845 = vmatpush1.msra.mxu0 0.0
    %1846 = vmatprep.subr.mxu0 0.0
    %1847 = vmatpush1.msra.mxu0 0.0
    %1848 = vmatprep.subr.mxu0 0.0
    %1849 = vmatpush1.msra.mxu0 0.0
    %1850 = vmatprep.subr.mxu0 0.0
    %1851 = vmatpush1.msra.mxu0 0.0
    %1852 = vmatprep.subr.mxu0 0.0
    %1853 = vmatpush1.msra.mxu0 0.0
    %1854 = vmatprep.subr.mxu0 0.0
    %1855 = vmatpush1.msra.mxu0 0.0
    %1856 = vmatprep.subr.mxu0 0.0
    %1857 = vmatpush1.msra.mxu0 0.0
    %1858 = vmatprep.subr.mxu0 0.0
    %1859 = vmatpush1.msra.mxu0 0.0
    %1860 = vmatprep.subr.mxu0 0.0
    %1861 = vmatpush1.msra.mxu0 0.0
    %1862 = vmatprep.subr.mxu0 0.0
    %1863 = vmatpush1.msra.mxu0 0.0
    %1864 = vmatprep.subr.mxu0 0.0
    %1865 = vmatpush1.msra.mxu0 0.0
    %1866 = vmatprep.subr.mxu0 0.0
    %1867 = vmatpush1.msra.mxu0 0.0
    %1868 = vmatprep.subr.mxu0 0.0
    %1869 = vmatpush1.msra.mxu0 0.0
    %1870 = vmatprep.subr.mxu0 0.0
    %1871 = vmatpush1.msra.mxu0 0.0
    %1872 = vmatprep.subr.mxu0 0.0
    %1873 = vmatpush1.msra.mxu0 0.0
    %1874 = vmatprep.subr.mxu0 0.0
    %1875 = vmatpush1.msra.mxu0 0.0
    %1876 = vmatprep.subr.mxu0 0.0
    %1877 = vmatpush1.msra.mxu0 0.0
    %1878 = vmatprep.subr.mxu0 0.0
    %1879 = vmatpush1.msra.mxu0 0.0
    %1880 = vmatprep.subr.mxu0 0.0
    %1881 = vmatpush1.msra.mxu0 0.0
    %1882 = vmatprep.subr.mxu0 0.0
    %1883 = vmatpush1.msra.mxu0 0.0
    %1884 = vmatprep.subr.mxu0 0.0
    %1885 = vmatpush1.msra.mxu0 0.0
    %1886 = vmatprep.mubr.f32.mxu0 0.0
    %1887 = vmatmul.mubr.f32.gmra.mrb[0].mxu0 %v1820
    %v1888 = vpop.f32.mrb[0].mxu0
    %v1889 = vadd.f32 0.0, %v1888
    %v1890 = vpop.f32.mrb[0].mxu0
    %1891 = vdwg.mxu0
    %v1893 = vrot.slane %v1889, 1
    %v1894 = vrot.slane %v1889, 2
    %v1897 = vadd.f32 %v189, %v1893
    %v1898 = vadd.f32 %v190, %v1894
    %v1899 = vxor.u32 %v1897, 2147483648
    %v1900 = vxor.u32 %v1898, 2147483648
    %v1901 = vmul.f32 %v1899, 1.442695
    %v1902 = vpow.pop %v1901
    %v1903 = vmul.f32 %v1900, 1.442695
    %v1904 = vpow.pop %v1903
    %v1905 = vadd.f32 %v1902, 1.0
    %v1906 = vadd.f32 %v1904, 1.0
    %v1907 = vrcp.pop %v1905
    %v1908 = vmul.f32 1.0, %v1907
    %v1909 = vrcp.pop %v1906
    %v1910 = vmul.f32 1.0, %v1909
    %v1911 = vtanh.pop %v1897
    %v1912 = vtanh.pop %v1898
    %v1915 = vrot.slane %v1689, 7
    %v1916 = vrot.slane %v1690, 7
    %v1919 = vmul.f32 %v1908, %v1915
    %v1920 = vmul.f32 %v1910, %v1916
    %1923 = vrot.lane.b32.xlu0 %v1911, 32
    %v1924 = vpop.permute.xlu0 %1923
    %1925 = vrot.lane.b32.xlu0 %v1912, 32
    %v1926 = vpop.permute.xlu0 %1925
    %v1929 = vmul.f32 %v1908, %v1924
    %v1930 = vmul.f32 %v1910, %v1926
    %1933 = vrot.lane.b32.xlu0 %v1929, 32
    %v1934 = vpop.permute.xlu0 %1933
    %1935 = vrot.lane.b32.xlu0 %v1930, 32
    %v1936 = vpop.permute.xlu0 %1935
    %v1939 = vadd.f32 %v1919, %v1934
    %v1940 = vadd.f32 %v1920, %v1936
    %v1941 = vtanh.pop %v1939
    %v1942 = vtanh.pop %v1940
    %1945 = vrot.lane.b32.xlu0 %v1941, 32
    %v1946 = vpop.permute.xlu0 %1945
    %1947 = vrot.lane.b32.xlu0 %v1942, 32
    %v1948 = vpop.permute.xlu0 %1947
    %v1951 = vmul.f32 %v1908, %v1946
    %v1952 = vmul.f32 %v1910, %v1948
    %v1953 = vrot.slane %v1702, 7
    %vm1954 = vcmask 1047559
    %v1955 = vsel %vm1954, %v1953, %v1701
    %1956 = vrot.lane.b32.xlu0 %v1955, 64
    %v1957 = vpop.permute.xlu0 %1956
    %v1960 = vrot.slane %v1812, 2
    %1961 = vrot.lane.b32.xlu0 %v1960, 96
    %v1962 = vpop.permute.xlu0 %1961
    %v1964 = vsel %vm191, %v1957, %v1962
    %v1966 = vrot.slane %v1964, 6
    %v1967 = vsel %vm466, %v1966, 0
    %1969 = vmatprep.subr.mxu0 0.0
    %1970 = vmatpush1.msra.mxu0 %v66
    %1971 = vmatprep.subr.mxu0 0.0
    %1972 = vmatpush1.msra.mxu0 %v67
    %1973 = vmatprep.subr.mxu0 0.0
    %1974 = vmatpush1.msra.mxu0 %v68
    %1975 = vmatprep.subr.mxu0 0.0
    %1976 = vmatpush1.msra.mxu0 %v69
    %1977 = vmatprep.subr.mxu0 0.0
    %1978 = vmatpush1.msra.mxu0 %v70
    %1979 = vmatprep.subr.mxu0 0.0
    %1980 = vmatpush1.msra.mxu0 %v71
    %1981 = vmatprep.subr.mxu0 0.0
    %1982 = vmatpush1.msra.mxu0 %v72
    %1983 = vmatprep.subr.mxu0 0.0
    %1984 = vmatpush1.msra.mxu0 %v73
    %1985 = vmatprep.subr.mxu0 0.0
    %1986 = vmatpush1.msra.mxu0 0.0
    %1987 = vmatprep.subr.mxu0 0.0
    %1988 = vmatpush1.msra.mxu0 0.0
    %1989 = vmatprep.subr.mxu0 0.0
    %1990 = vmatpush1.msra.mxu0 0.0
    %1991 = vmatprep.subr.mxu0 0.0
    %1992 = vmatpush1.msra.mxu0 0.0
    %1993 = vmatprep.subr.mxu0 0.0
    %1994 = vmatpush1.msra.mxu0 0.0
    %1995 = vmatprep.subr.mxu0 0.0
    %1996 = vmatpush1.msra.mxu0 0.0
    %1997 = vmatprep.subr.mxu0 0.0
    %1998 = vmatpush1.msra.mxu0 0.0
    %1999 = vmatprep.subr.mxu0 0.0
    %2000 = vmatpush1.msra.mxu0 0.0
    %2001 = vmatprep.subr.mxu0 0.0
    %2002 = vmatpush1.msra.mxu0 0.0
    %2003 = vmatprep.subr.mxu0 0.0
    %2004 = vmatpush1.msra.mxu0 0.0
    %2005 = vmatprep.subr.mxu0 0.0
    %2006 = vmatpush1.msra.mxu0 0.0
    %2007 = vmatprep.subr.mxu0 0.0
    %2008 = vmatpush1.msra.mxu0 0.0
    %2009 = vmatprep.subr.mxu0 0.0
    %2010 = vmatpush1.msra.mxu0 0.0
    %2011 = vmatprep.subr.mxu0 0.0
    %2012 = vmatpush1.msra.mxu0 0.0
    %2013 = vmatprep.subr.mxu0 0.0
    %2014 = vmatpush1.msra.mxu0 0.0
    %2015 = vmatprep.subr.mxu0 0.0
    %2016 = vmatpush1.msra.mxu0 0.0
    %2017 = vmatprep.subr.mxu0 0.0
    %2018 = vmatpush1.msra.mxu0 0.0
    %2019 = vmatprep.subr.mxu0 0.0
    %2020 = vmatpush1.msra.mxu0 0.0
    %2021 = vmatprep.subr.mxu0 0.0
    %2022 = vmatpush1.msra.mxu0 0.0
    %2023 = vmatprep.subr.mxu0 0.0
    %2024 = vmatpush1.msra.mxu0 0.0
    %2025 = vmatprep.subr.mxu0 0.0
    %2026 = vmatpush1.msra.mxu0 0.0
    %2027 = vmatprep.subr.mxu0 0.0
    %2028 = vmatpush1.msra.mxu0 0.0
    %2029 = vmatprep.subr.mxu0 0.0
    %2030 = vmatpush1.msra.mxu0 0.0
    %2031 = vmatprep.subr.mxu0 0.0
    %2032 = vmatpush1.msra.mxu0 0.0
    %2033 = vmatprep.mubr.f32.mxu0 0.0
    %2034 = vmatmul.mubr.f32.gmra.mrb[0].mxu0 %v1967
    %v2035 = vpop.f32.mrb[0].mxu0
    %v2036 = vadd.f32 %v464, %v2035
    %v2037 = vpop.f32.mrb[0].mxu0
    %2038 = vdwg.mxu0
    %v2039 = vxor.u32 %v2036, 2147483648
    %v2040 = vmul.f32 %v2039, 1.442695
    %v2041 = vpow.pop %v2040
    %v2042 = vadd.f32 %v2041, 1.0
    %v2043 = vrcp.pop %v2042
    %v2044 = vmul.f32 1.0, %v2043
    %v2045 = vtanh.pop %v2036
    %v2046 = vmul.f32 %v2044, %v1806
    %2048 = vrot.lane.b32.xlu0 %v2045, 32
    %v2049 = vpop.permute.xlu0 %2048
    %v2051 = vmul.f32 %v2044, %v2049
    %2053 = vrot.lane.b32.xlu0 %v2051, 32
    %v2054 = vpop.permute.xlu0 %2053
    %v2056 = vadd.f32 %v2046, %v2054
    %v2057 = vtanh.pop %v2056
    %2059 = vrot.lane.b32.xlu0 %v2057, 32
    %v2060 = vpop.permute.xlu0 %2059
    %v2062 = vmul.f32 %v2044, %v2060
    %v2065 = vrot.slane %v1952, 7
    %2066 = vrot.lane.b32.xlu0 %v1951, 64
    %v2067 = vpop.permute.xlu0 %2066
    %2068 = vrot.lane.b32.xlu0 %v2065, 64
    %v2069 = vpop.permute.xlu0 %2068
    %v2073 = vrot.slane %v2062, 1
    %2074 = vrot.lane.b32.xlu0 %v2073, 96
    %v2075 = vpop.permute.xlu0 %2074
    %v2077 = vsel %vm191, %v2067, %v2075
    %v2078 = vsel %vm191, %v2069, %v2075
    %vm2081 = vcmask 1040384
    %v2082 = vrot.slane %v2077, 7
    %v2083 = vrot.slane %v2078, 7
    %v2084 = vsel %vm2081, %v2082, %v2083
    %v2085 = vsel %vm466, %v2084, 0
    %2087 = vmatprep.subr.mxu0 0.0
    %2088 = vmatpush1.msra.mxu0 %v66
    %2089 = vmatprep.subr.mxu0 0.0
    %2090 = vmatpush1.msra.mxu0 %v67
    %2091 = vmatprep.subr.mxu0 0.0
    %2092 = vmatpush1.msra.mxu0 %v68
    %2093 = vmatprep.subr.mxu0 0.0
    %2094 = vmatpush1.msra.mxu0 %v69
    %2095 = vmatprep.subr.mxu0 0.0
    %2096 = vmatpush1.msra.mxu0 %v70
    %2097 = vmatprep.subr.mxu0 0.0
    %2098 = vmatpush1.msra.mxu0 %v71
    %2099 = vmatprep.subr.mxu0 0.0
    %2100 = vmatpush1.msra.mxu0 %v72
    %2101 = vmatprep.subr.mxu0 0.0
    %2102 = vmatpush1.msra.mxu0 %v73
    %2103 = vmatprep.subr.mxu0 0.0
    %2104 = vmatpush1.msra.mxu0 0.0
    %2105 = vmatprep.subr.mxu0 0.0
    %2106 = vmatpush1.msra.mxu0 0.0
    %2107 = vmatprep.subr.mxu0 0.0
    %2108 = vmatpush1.msra.mxu0 0.0
    %2109 = vmatprep.subr.mxu0 0.0
    %2110 = vmatpush1.msra.mxu0 0.0
    %2111 = vmatprep.subr.mxu0 0.0
    %2112 = vmatpush1.msra.mxu0 0.0
    %2113 = vmatprep.subr.mxu0 0.0
    %2114 = vmatpush1.msra.mxu0 0.0
    %2115 = vmatprep.subr.mxu0 0.0
    %2116 = vmatpush1.msra.mxu0 0.0
    %2117 = vmatprep.subr.mxu0 0.0
    %2118 = vmatpush1.msra.mxu0 0.0
    %2119 = vmatprep.subr.mxu0 0.0
    %2120 = vmatpush1.msra.mxu0 0.0
    %2121 = vmatprep.subr.mxu0 0.0
    %2122 = vmatpush1.msra.mxu0 0.0
    %2123 = vmatprep.subr.mxu0 0.0
    %2124 = vmatpush1.msra.mxu0 0.0
    %2125 = vmatprep.subr.mxu0 0.0
    %2126 = vmatpush1.msra.mxu0 0.0
    %2127 = vmatprep.subr.mxu0 0.0
    %2128 = vmatpush1.msra.mxu0 0.0
    %2129 = vmatprep.subr.mxu0 0.0
    %2130 = vmatpush1.msra.mxu0 0.0
    %2131 = vmatprep.subr.mxu0 0.0
    %2132 = vmatpush1.msra.mxu0 0.0
    %2133 = vmatprep.subr.mxu0 0.0
    %2134 = vmatpush1.msra.mxu0 0.0
    %2135 = vmatprep.subr.mxu0 0.0
    %2136 = vmatpush1.msra.mxu0 0.0
    %2137 = vmatprep.subr.mxu0 0.0
    %2138 = vmatpush1.msra.mxu0 0.0
    %2139 = vmatprep.subr.mxu0 0.0
    %2140 = vmatpush1.msra.mxu0 0.0
    %2141 = vmatprep.subr.mxu0 0.0
    %2142 = vmatpush1.msra.mxu0 0.0
    %2143 = vmatprep.subr.mxu0 0.0
    %2144 = vmatpush1.msra.mxu0 0.0
    %2145 = vmatprep.subr.mxu0 0.0
    %2146 = vmatpush1.msra.mxu0 0.0
    %2147 = vmatprep.subr.mxu0 0.0
    %2148 = vmatpush1.msra.mxu0 0.0
    %2149 = vmatprep.subr.mxu0 0.0
    %2150 = vmatpush1.msra.mxu0 0.0
    %2151 = vmatprep.mubr.f32.mxu0 0.0
    %2152 = vmatmul.mubr.f32.gmra.mrb[0].mxu0 %v2085
    %v2153 = vpop.f32.mrb[0].mxu0
    %v2154 = vadd.f32 %v464, %v2153
    %v2155 = vpop.f32.mrb[0].mxu0
    %2156 = vdwg.mxu0
    %v2157 = vxor.u32 %v2154, 2147483648
    %v2158 = vmul.f32 %v2157, 1.442695
    %v2159 = vpow.pop %v2158
    %v2160 = vadd.f32 %v2159, 1.0
    %v2161 = vrcp.pop %v2160
    %v2162 = vmul.f32 1.0, %v2161
    %v2163 = vtanh.pop %v2154
    %v2164 = vmul.f32 %v2162, %v2056
    %2166 = vrot.lane.b32.xlu0 %v2163, 32
    %v2167 = vpop.permute.xlu0 %2166
    %v2169 = vmul.f32 %v2162, %v2167
    %2171 = vrot.lane.b32.xlu0 %v2169, 32
    %v2172 = vpop.permute.xlu0 %2171
    %v2174 = vadd.f32 %v2164, %v2172
    %v2175 = vtanh.pop %v2174
    %2177 = vrot.lane.b32.xlu0 %v2175, 32
    %v2178 = vpop.permute.xlu0 %2177
    %v2180 = vmul.f32 %v2162, %v2178
    %2182 = vrot.lane.b32.xlu0 %v2180, 64
    %v2183 = vpop.permute.xlu0 %2182
    %vm2185 = vcmask 254976
    %v2186 = vsel %vm2185, %v2183, 0.0
    %2187 = vadd.xlane.f32.xlu0 %v2186
    %v2188 = vpop.xlane.xlu0 %2187
    %v2189 = vrcp.pop 32.0
    %v2190 = vmul.f32 %v2188, %v2189
    %v2191 = vsub.f32 %v2180, %v2190
    %v2192 = vmul.f32 %v2191, %v2191
    %2194 = vrot.lane.b32.xlu0 %v2192, 64
    %v2195 = vpop.permute.xlu0 %2194
    %v2197 = vsel %vm2185, %v2195, 0.0
    %2198 = vadd.xlane.f32.xlu0 %v2197
    %v2199 = vpop.xlane.xlu0 %2198
    %v2200 = vmul.f32 %v2199, %v2189
    %v2201 = vadd.f32 %v2200, 1e-05
    %v2202 = vrsqrt.pop %v2201
    %v2203 = vmul.f32 %v2191, %v2202
    %v2204 = vld [vmem:[%s8] sm:$0x1]
    %v2206 = vlaneseq
    %v2207 = vshrl.u32 %v2206, 7
    %v2208 = vsub.s32 0, %v2207
    %v2209 = vrot.slane %v2204, %v2208
    %2210 = vrot.lane.b32.xlu0 %v2209, 64
    %v2211 = vpop.permute.xlu0 %2210
    %v2213 = vmul.f32 %v2203, %v2211
    %v2214 = vld [vmem:[%s9] sm:$0x1]
    %v2216 = vlaneseq
    %v2217 = vshrl.u32 %v2216, 7
    %v2218 = vsub.s32 0, %v2217
    %v2219 = vrot.slane %v2214, %v2218
    %2220 = vrot.lane.b32.xlu0 %v2219, 64
    %v2221 = vpop.permute.xlu0 %2220
    %v2223 = vadd.f32 %v2213, %v2221
    %v2224 = vld [vmem:[%s10] sm:$0xff]
    %v2225 = vld [vmem:[%s10 + $0x8] sm:$0xff]
    %v2226 = vld [vmem:[%s10 + $0x10] sm:$0xff]
    %v2227 = vld [vmem:[%s10 + $0x18] sm:$0xff]
    %v2228 = vld [vmem:[%s11] sm:$0x1]
    %v2230 = vlaneseq
    %v2231 = vshrl.u32 %v2230, 7
    %v2232 = vsub.s32 0, %v2231
    %v2233 = vrot.slane %v2228, %v2232
    %2236 = vrot.lane.b32.xlu0 %v2223, 64
    %v2237 = vpop.permute.xlu0 %2236
    %v2238 = vsel %vm191, %v2237, 0
    %2240 = vmatprep.subr.mxu0 0.0
    %2241 = vmatpush1.msra.mxu0 %v2224
    %2242 = vmatprep.subr.mxu0 0.0
    %2243 = vmatpush1.msra.mxu0 %v2225
    %2244 = vmatprep.subr.mxu0 0.0
    %2245 = vmatpush1.msra.mxu0 %v2226
    %2246 = vmatprep.subr.mxu0 0.0
    %2247 = vmatpush1.msra.mxu0 %v2227
    %2248 = vmatprep.subr.mxu0 0.0
    %2249 = vmatpush1.msra.mxu0 0.0
    %2250 = vmatprep.subr.mxu0 0.0
    %2251 = vmatpush1.msra.mxu0 0.0
    %2252 = vmatprep.subr.mxu0 0.0
    %2253 = vmatpush1.msra.mxu0 0.0
    %2254 = vmatprep.subr.mxu0 0.0
    %2255 = vmatpush1.msra.mxu0 0.0
    %2256 = vmatprep.subr.mxu0 0.0
    %2257 = vmatpush1.msra.mxu0 0.0
    %2258 = vmatprep.subr.mxu0 0.0
    %2259 = vmatpush1.msra.mxu0 0.0
    %2260 = vmatprep.subr.mxu0 0.0
    %2261 = vmatpush1.msra.mxu0 0.0
    %2262 = vmatprep.subr.mxu0 0.0
    %2263 = vmatpush1.msra.mxu0 0.0
    %2264 = vmatprep.subr.mxu0 0.0
    %2265 = vmatpush1.msra.mxu0 0.0
    %2266 = vmatprep.subr.mxu0 0.0
    %2267 = vmatpush1.msra.mxu0 0.0
    %2268 = vmatprep.subr.mxu0 0.0
    %2269 = vmatpush1.msra.mxu0 0.0
    %2270 = vmatprep.subr.mxu0 0.0
    %2271 = vmatpush1.msra.mxu0 0.0
    %2272 = vmatprep.subr.mxu0 0.0
    %2273 = vmatpush1.msra.mxu0 0.0
    %2274 = vmatprep.subr.mxu0 0.0
    %2275 = vmatpush1.msra.mxu0 0.0
    %2276 = vmatprep.subr.mxu0 0.0
    %2277 = vmatpush1.msra.mxu0 0.0
    %2278 = vmatprep.subr.mxu0 0.0
    %2279 = vmatpush1.msra.mxu0 0.0
    %2280 = vmatprep.subr.mxu0 0.0
    %2281 = vmatpush1.msra.mxu0 0.0
    %2282 = vmatprep.subr.mxu0 0.0
    %2283 = vmatpush1.msra.mxu0 0.0
    %2284 = vmatprep.subr.mxu0 0.0
    %2285 = vmatpush1.msra.mxu0 0.0
    %2286 = vmatprep.subr.mxu0 0.0
    %2287 = vmatpush1.msra.mxu0 0.0
    %2288 = vmatprep.subr.mxu0 0.0
    %2289 = vmatpush1.msra.mxu0 0.0
    %2290 = vmatprep.subr.mxu0 0.0
    %2291 = vmatpush1.msra.mxu0 0.0
    %2292 = vmatprep.subr.mxu0 0.0
    %2293 = vmatpush1.msra.mxu0 0.0
    %2294 = vmatprep.subr.mxu0 0.0
    %2295 = vmatpush1.msra.mxu0 0.0
    %2296 = vmatprep.subr.mxu0 0.0
    %2297 = vmatpush1.msra.mxu0 0.0
    %2298 = vmatprep.subr.mxu0 0.0
    %2299 = vmatpush1.msra.mxu0 0.0
    %2300 = vmatprep.subr.mxu0 0.0
    %2301 = vmatpush1.msra.mxu0 0.0
    %2302 = vmatprep.subr.mxu0 0.0
    %2303 = vmatpush1.msra.mxu0 0.0
    %2304 = vmatprep.mubr.f32.mxu0 0.0
    %2305 = vmatmul.mubr.f32.gmra.mrb[0].mxu0 %v2238
    %v2306 = vpop.f32.mrb[0].mxu0
    %v2307 = vadd.f32 %v2233, %v2306
    %v2308 = vpop.f32.mrb[0].mxu0
    %2309 = vdwg.mxu0
    %v2310 = vld [vmem:[%s12] sm:$0x1]
    %v2312 = vlaneseq
    %v2313 = vshrl.u32 %v2312, 7
    %v2314 = vsub.s32 0, %v2313
    %v2315 = vrot.slane %v2310, %v2314
    %v2317 = vmul.f32 %v2307, %v2315
    %v2318 = vld [vmem:[%s13] sm:$0x1]
    %v2320 = vlaneseq
    %v2321 = vshrl.u32 %v2320, 7
    %v2322 = vsub.s32 0, %v2321
    %v2323 = vrot.slane %v2318, %v2322
    %v2325 = vadd.f32 %v2317, %v2323
    %vm2326 = vcmask 17408
    %2327 = vst.msk [vmem:[#allocation5] sm:$0x3] %vm2326, %v2325
    // Predicated region
    $region62: #{tpu_custom_call.1} parent=1 // pred_check
      _
    $region63: #{tpu_custom_call.1} parent=1 // pred_check_branch
      %2329 = sbr.rel (0) target = $region65
    $region64: #{tpu_custom_call.1} parent=1 // pred_region
      %s2331 = ssub.s32 32, 32
      %2332 = vsyncadd [#allocation4], %s2331
      %s2334 = sshll.u32 [#allocation5], 4
      %s2335 = int_to_ptr.vmem [resolvable:$true] %s2334
      %2337 = dma.vmem_to_hbm [thread:$0]  %s2335, 32, %s14, [#allocation4]
    $region65: #{tpu_custom_call.1} parent=1 // pred_fallthru
      _
    // Predicated region
    $region66: #{tpu_custom_call.1} parent=1 // pred_check
      _
    $region67: #{tpu_custom_call.1} parent=1 // pred_check_branch
      %2339 = sbr.rel (0) target = $region69
    $region68: #{tpu_custom_call.1} parent=1 // pred_region
      %2340 = dma.done [#allocation4], 32
    $region69: #{tpu_custom_call.1} parent=1 // pred_fallthru
      _
    %2341 = vsyncpa [#allocation3], 1
    %2342 = vsyncpa [#allocation4], 1

</llo_original>
